<compile_context>
chip_gen: v6e
topology: v6e:2x2x1
jax: 0.10.0
libtpu: 0.0.40
codegen_flags: <defaults>
</compile_context>

<pallas_src>
import jax
import jax.numpy as jnp
from jax.experimental import pallas as pl
from jax.experimental.pallas import tpu as pltpu

LANE = 128
LAYER_DIMS = (256, 128, 64, 32, 4)   # true (unpadded) output widths per layer
OUT_PAD = 8                          # final logits padded to 8 sublanes (4 real)


def _round_up(n, m):
    return ((n + m - 1) // m) * m


def mlp_kernel(x_ref,
               w1_ref, b1_ref,
               w2_ref, b2_ref,
               w3_ref, b3_ref,
               w4_ref, b4_ref,
               w5t_ref, b5_ref,
               o_ref):
    """Fused fc1->ReLU->...->fc5 on one batch tile; logits stored transposed."""
    h = x_ref[...].astype(jnp.bfloat16)   # no-op if x is already bf16 upstream

    def hidden(h, w_ref, b_ref):
        # bf16 operands on the MXU with f32 accumulation; bias-add + ReLU stay
        # in f32 on the VPU; one cast back to bf16 feeds the next layer's dot.
        z = jnp.dot(h, w_ref[...], preferred_element_type=jnp.float32) + b_ref[...]
        return jnp.maximum(z, 0.0).astype(jnp.bfloat16)

    h = hidden(h, w1_ref, b1_ref)
    h = hidden(h, w2_ref, b2_ref)
    h = hidden(h, w3_ref, b3_ref)
    h = hidden(h, w4_ref, b4_ref)

    # Final layer computed directly in (logits, batch) orientation:
    #   w5t: (OUT_PAD, in_pad), h: (tile_b, in_pad); contract the in_pad axis of
    #   both -> (OUT_PAD, tile_b).  Lane-dense store, 16x less HBM writeback than
    #   a (tile_b, 128)-padded f32 slab, and no in-kernel transpose required.
    z = jax.lax.dot_general(w5t_ref[...], h, (((1,), (1,)), ((), ())),
                            preferred_element_type=jnp.float32)
    o_ref[...] = z + b5_ref[...]           # b5: (OUT_PAD, 1) broadcasts over lanes


def _choose_tiling(batch, max_tile_b):
    """Pick (tile_b, padded_batch).

    Single-TC chips (v5e/v6e): one big step when it fits (zero extra per-step
    pipeline overhead).  Dual-TC (v7x): an even number of steps >= 2 so the
    "parallel" batch axis gives work to both TensorCores.  Tiles above one step
    are 128-aligned so the transposed output block stays lane-dense.
    """
    max_tile_b = max(int(max_tile_b), LANE)
    try:
        kind = jax.devices()[0].device_kind.lower()
    except Exception:
        kind = ""
    dual_tc = "v7" in kind
    min_steps = 2 if (dual_tc and batch > LANE) else 1

    def tile_for(steps):
        per_step = -(-batch // steps)           # ceil(batch / steps)
        align = LANE if steps > 1 else 8
        return _round_up(per_step, align)

    steps = min_steps
    while tile_for(steps) > max_tile_b:
        steps += 2 if dual_tc else 1
    tile_b = tile_for(steps)
    b_pad = _round_up(batch, tile_b)
    return tile_b, b_pad


def classification_nn_forward(x, padded_params, *, max_tile_b=1024):
    """x: [B, F] (f32 or bf16). padded_params: pad_and_cast_params() output."""
    B, F = x.shape
    tile_b, b_pad = _choose_tiling(B, max_tile_b)
    if b_pad != B:
        x = jnp.pad(x, ((0, b_pad - B), (0, 0)))

    flat_args = [x]
    for w, b in padded_params:
        flat_args += [w, b]

    def build_and_run(single_buffer_params):
        # Weights / biases: full block, constant index_map -> VMEM-resident.
        param_specs = []
        for w, b in padded_params:
            for arr in (w, b):
                if single_buffer_params:
                    param_specs.append(
                        pl.BlockSpec(arr.shape, lambda i: (0, 0),
                                     pipeline_mode=pl.Buffered(1)))
                else:
                    param_specs.append(pl.BlockSpec(arr.shape, lambda i: (0, 0)))

        in_specs = [pl.BlockSpec((tile_b, F), lambda i: (i, 0))] + param_specs
        out_spec = pl.BlockSpec((OUT_PAD, tile_b), lambda i: (0, i))

        return pl.pallas_call(
            mlp_kernel,
            out_shape=jax.ShapeDtypeStruct((OUT_PAD, b_pad), jnp.float32),
            grid=(b_pad // tile_b,),
            in_specs=in_specs,
            out_specs=out_spec,
            compiler_params=pltpu.CompilerParams(
                dimension_semantics=("parallel",)),
        )(*flat_args)

    try:
        # Grid-invariant params single-buffered (saves a redundant VMEM buffer set).
        out = build_and_run(True)
    except Exception:
        # Older/other JAX without BlockSpec pipeline_mode support: default buffering.
        out = build_and_run(False)

    # (OUT_PAD, b_pad) slab -> (B, 4) logits.
    return out[:LAYER_DIMS[-1], :B].T


def init_params(key, input_size):
    """Deterministic init mimicking nn.Linear's uniform(+-1/sqrt(fan_in)) init.

    Weights stored as [in, out] (transpose of PyTorch's [out, in]) for x @ W.
    """
    dims = [input_size] + list(LAYER_DIMS)
    params = []
    for i in range(len(dims) - 1):
        fan_in, fan_out = dims[i], dims[i + 1]
        key, kw, kb = jax.random.split(key, 3)
        bound = float(fan_in) ** -0.5
        w = jax.random.uniform(kw, (fan_in, fan_out), jnp.float32, -bound, bound)
        b = jax.random.uniform(kb, (fan_out,), jnp.float32, -bound, bound)
        params.append((w, b))
    return params


def pad_and_cast_params(params, input_size):
    """Hidden layers: zero-pad widths < 128 up to 128 lanes, weights -> bf16.
    Final layer: stored transposed as (OUT_PAD, in_pad) so the kernel emits a
    lane-dense (OUT_PAD, tile_b) output slab.  Padding is numerically exact."""
    padded = []
    prev_pad = input_size                     # full-dim block is legal for the input
    last = len(params) - 1
    for idx, (w, b) in enumerate(params):
        in_dim, out_dim = w.shape
        if idx < last:
            out_pad = out_dim if out_dim % LANE == 0 else _round_up(out_dim, LANE)
            wp = jnp.zeros((prev_pad, out_pad), jnp.float32).at[:in_dim, :out_dim].set(w)
            bp = jnp.zeros((1, out_pad), jnp.float32).at[0, :out_dim].set(b)
            padded.append((wp.astype(jnp.bfloat16), bp))
            prev_pad = out_pad
        else:
            wp = jnp.zeros((OUT_PAD, prev_pad), jnp.float32).at[:out_dim, :in_dim].set(w.T)
            bp = jnp.zeros((OUT_PAD, 1), jnp.float32).at[:out_dim, 0].set(b)
            padded.append((wp.astype(jnp.bfloat16), bp))
    return padded


def reference_forward(x, padded_params):
    """Plain-JAX reference with the SAME bf16 rounding of weights/activations."""
    h = x.astype(jnp.bfloat16)
    for w, b in padded_params[:-1]:
        z = jnp.dot(h, w, preferred_element_type=jnp.float32) + b
        h = jnp.maximum(z, 0.0).astype(jnp.bfloat16)
    w5t, b5 = padded_params[-1]
    z = jax.lax.dot_general(w5t, h, (((1,), (1,)), ((), ())),
                            preferred_element_type=jnp.float32) + b5
    return z[:LAYER_DIMS[-1], :].T


if __name__ == "__main__":
    key = jax.random.PRNGKey(0)
    key, kx = jax.random.split(key)

    input_size = 32   # train_X.shape[1] stand-in
    batch = 256       # 1 step on single-TC chips, 2x128-row steps on v7x

    x = jax.random.normal(kx, (batch, input_size), jnp.float32)
    params = init_params(key, input_size)
    padded_params = pad_and_cast_params(params, input_size)

    out = classification_nn_forward(x, padded_params)
    out = jax.block_until_ready(out)

    ref = reference_forward(x, padded_params)
    assert out.shape == (batch, 4)
    # Kernel and reference now share identical bf16 rounding -> tight tolerance.
    assert jnp.allclose(out, ref, atol=1e-2, rtol=1e-2), "mismatch vs reference"

    print("KERNEL_OK")
</pallas_src>

<mosaic_0001>
module attributes {stable_mosaic.version = 11 : i64} {
  func.func @mlp_kernel(%arg0: i32, %arg1: memref<256x32xf32, #tpu.memory_space<vmem>>, %arg2: memref<32x256xbf16, #tpu.memory_space<vmem>>, %arg3: memref<1x256xf32, #tpu.memory_space<vmem>>, %arg4: memref<256x128xbf16, #tpu.memory_space<vmem>>, %arg5: memref<1x128xf32, #tpu.memory_space<vmem>>, %arg6: memref<128x128xbf16, #tpu.memory_space<vmem>>, %arg7: memref<1x128xf32, #tpu.memory_space<vmem>>, %arg8: memref<128x128xbf16, #tpu.memory_space<vmem>>, %arg9: memref<1x128xf32, #tpu.memory_space<vmem>>, %arg10: memref<8x128xbf16, #tpu.memory_space<vmem>>, %arg11: memref<8x1xf32, #tpu.memory_space<vmem>>, %arg12: memref<8x256xf32, #tpu.memory_space<vmem>>) attributes {dimension_semantics = [#tpu.dimension_semantics<parallel>], iteration_bounds = array<i64: 1>, scalar_prefetch = 0 : i64, scratch_operands = 0 : i64, tpu.core_type = #tpu.core_type<tc>, window_params = [{transform_indices = @transform_0, window_bounds = array<i64: 256, 32>}, {pipeline_mode = #tpu.pipeline_mode<synchronous>, transform_indices = @transform_1, window_bounds = array<i64: 32, 256>}, {pipeline_mode = #tpu.pipeline_mode<synchronous>, transform_indices = @transform_2, window_bounds = array<i64: 1, 256>}, {pipeline_mode = #tpu.pipeline_mode<synchronous>, transform_indices = @transform_3, window_bounds = array<i64: 256, 128>}, {pipeline_mode = #tpu.pipeline_mode<synchronous>, transform_indices = @transform_4, window_bounds = array<i64: 1, 128>}, {pipeline_mode = #tpu.pipeline_mode<synchronous>, transform_indices = @transform_5, window_bounds = array<i64: 128, 128>}, {pipeline_mode = #tpu.pipeline_mode<synchronous>, transform_indices = @transform_6, window_bounds = array<i64: 1, 128>}, {pipeline_mode = #tpu.pipeline_mode<synchronous>, transform_indices = @transform_7, window_bounds = array<i64: 128, 128>}, {pipeline_mode = #tpu.pipeline_mode<synchronous>, transform_indices = @transform_8, window_bounds = array<i64: 1, 128>}, {pipeline_mode = #tpu.pipeline_mode<synchronous>, transform_indices = @transform_9, window_bounds = array<i64: 8, 128>}, {pipeline_mode = #tpu.pipeline_mode<synchronous>, transform_indices = @transform_10, window_bounds = array<i64: 8, 1>}, {transform_indices = @transform_11, window_bounds = array<i64: 8, 256>}]} {
    %c0 = arith.constant 0 : index
    %c0_0 = arith.constant 0 : index
    %0 = vector.load %arg1[%c0, %c0_0] : memref<256x32xf32, #tpu.memory_space<vmem>>, vector<256x32xf32>
    %1 = arith.truncf %0 : vector<256x32xf32> to vector<256x32xbf16>
    %c0_1 = arith.constant 0 : index
    %c0_2 = arith.constant 0 : index
    %2 = vector.load %arg2[%c0_1, %c0_2] : memref<32x256xbf16, #tpu.memory_space<vmem>>, vector<32x256xbf16>
    %cst = arith.constant dense<0.000000e+00> : vector<256x256xf32>
    %3 = tpu.matmul %1, %2, %cst {dimension_numbers = #tpu.dot_dimension_numbers<[1], [0], [0], [1], [0, 0, 1, 1], [], []>} : vector<256x32xbf16>, vector<32x256xbf16>, vector<256x256xf32> -> vector<256x256xf32>
    %c0_3 = arith.constant 0 : index
    %c0_4 = arith.constant 0 : index
    %4 = vector.load %arg3[%c0_3, %c0_4] : memref<1x256xf32, #tpu.memory_space<vmem>>, vector<1x256xf32>
    %5 = vector.broadcast %4 : vector<1x256xf32> to vector<256x256xf32>
    %6 = arith.addf %3, %5 : vector<256x256xf32>
    %cst_5 = arith.constant 0.000000e+00 : f32
    %7 = vector.broadcast %cst_5 : f32 to vector<256x256xf32>
    %8 = arith.maximumf %6, %7 : vector<256x256xf32>
    %9 = arith.truncf %8 : vector<256x256xf32> to vector<256x256xbf16>
    %c0_6 = arith.constant 0 : index
    %c0_7 = arith.constant 0 : index
    %10 = vector.load %arg4[%c0_6, %c0_7] : memref<256x128xbf16, #tpu.memory_space<vmem>>, vector<256x128xbf16>
    %cst_8 = arith.constant dense<0.000000e+00> : vector<256x128xf32>
    %11 = tpu.matmul %9, %10, %cst_8 {dimension_numbers = #tpu.dot_dimension_numbers<[1], [0], [0], [1], [0, 0, 1, 1], [], []>} : vector<256x256xbf16>, vector<256x128xbf16>, vector<256x128xf32> -> vector<256x128xf32>
    %c0_9 = arith.constant 0 : index
    %c0_10 = arith.constant 0 : index
    %12 = vector.load %arg5[%c0_9, %c0_10] : memref<1x128xf32, #tpu.memory_space<vmem>>, vector<1x128xf32>
    %13 = vector.broadcast %12 : vector<1x128xf32> to vector<256x128xf32>
    %14 = arith.addf %11, %13 : vector<256x128xf32>
    %cst_11 = arith.constant 0.000000e+00 : f32
    %15 = vector.broadcast %cst_11 : f32 to vector<256x128xf32>
    %16 = arith.maximumf %14, %15 : vector<256x128xf32>
    %17 = arith.truncf %16 : vector<256x128xf32> to vector<256x128xbf16>
    %c0_12 = arith.constant 0 : index
    %c0_13 = arith.constant 0 : index
    %18 = vector.load %arg6[%c0_12, %c0_13] : memref<128x128xbf16, #tpu.memory_space<vmem>>, vector<128x128xbf16>
    %cst_14 = arith.constant dense<0.000000e+00> : vector<256x128xf32>
    %19 = tpu.matmul %17, %18, %cst_14 {dimension_numbers = #tpu.dot_dimension_numbers<[1], [0], [0], [1], [0, 0, 1, 1], [], []>} : vector<256x128xbf16>, vector<128x128xbf16>, vector<256x128xf32> -> vector<256x128xf32>
    %c0_15 = arith.constant 0 : index
    %c0_16 = arith.constant 0 : index
    %20 = vector.load %arg7[%c0_15, %c0_16] : memref<1x128xf32, #tpu.memory_space<vmem>>, vector<1x128xf32>
    %21 = vector.broadcast %20 : vector<1x128xf32> to vector<256x128xf32>
    %22 = arith.addf %19, %21 : vector<256x128xf32>
    %cst_17 = arith.constant 0.000000e+00 : f32
    %23 = vector.broadcast %cst_17 : f32 to vector<256x128xf32>
    %24 = arith.maximumf %22, %23 : vector<256x128xf32>
    %25 = arith.truncf %24 : vector<256x128xf32> to vector<256x128xbf16>
    %c0_18 = arith.constant 0 : index
    %c0_19 = arith.constant 0 : index
    %26 = vector.load %arg8[%c0_18, %c0_19] : memref<128x128xbf16, #tpu.memory_space<vmem>>, vector<128x128xbf16>
    %cst_20 = arith.constant dense<0.000000e+00> : vector<256x128xf32>
    %27 = tpu.matmul %25, %26, %cst_20 {dimension_numbers = #tpu.dot_dimension_numbers<[1], [0], [0], [1], [0, 0, 1, 1], [], []>} : vector<256x128xbf16>, vector<128x128xbf16>, vector<256x128xf32> -> vector<256x128xf32>
    %c0_21 = arith.constant 0 : index
    %c0_22 = arith.constant 0 : index
    %28 = vector.load %arg9[%c0_21, %c0_22] : memref<1x128xf32, #tpu.memory_space<vmem>>, vector<1x128xf32>
    %29 = vector.broadcast %28 : vector<1x128xf32> to vector<256x128xf32>
    %30 = arith.addf %27, %29 : vector<256x128xf32>
    %cst_23 = arith.constant 0.000000e+00 : f32
    %31 = vector.broadcast %cst_23 : f32 to vector<256x128xf32>
    %32 = arith.maximumf %30, %31 : vector<256x128xf32>
    %33 = arith.truncf %32 : vector<256x128xf32> to vector<256x128xbf16>
    %c0_24 = arith.constant 0 : index
    %c0_25 = arith.constant 0 : index
    %34 = vector.load %arg10[%c0_24, %c0_25] : memref<8x128xbf16, #tpu.memory_space<vmem>>, vector<8x128xbf16>
    %cst_26 = arith.constant dense<0.000000e+00> : vector<8x256xf32>
    %35 = tpu.matmul %34, %33, %cst_26 {dimension_numbers = #tpu.dot_dimension_numbers<[1], [1], [0], [0], [0, 0, 1, 0], [], []>} : vector<8x128xbf16>, vector<256x128xbf16>, vector<8x256xf32> -> vector<8x256xf32>
    %c0_27 = arith.constant 0 : index
    %c0_28 = arith.constant 0 : index
    %36 = vector.load %arg11[%c0_27, %c0_28] : memref<8x1xf32, #tpu.memory_space<vmem>>, vector<8x1xf32>
    %37 = vector.broadcast %36 : vector<8x1xf32> to vector<8x256xf32>
    %38 = arith.addf %35, %37 : vector<8x256xf32>
    %c0_29 = arith.constant 0 : index
    %c0_30 = arith.constant 0 : index
    %39 = vector.load %arg12[%c0_29, %c0_30] : memref<8x256xf32, #tpu.memory_space<vmem>>, vector<8x256xf32>
    tpu.vector_store %arg12[%c0_29, %c0_30], %38 {strides = array<i32>} : memref<8x256xf32, #tpu.memory_space<vmem>>, vector<8x256xf32>,
    return
  }
  func.func @transform_0(%arg0: i32) -> (i32, i32) {
    %c0_i32 = arith.constant 0 : i32
    %c0_i32_0 = arith.constant 0 : i32
    return %arg0, %c0_i32 : i32, i32
  }
  func.func @transform_1(%arg0: i32) -> (i32, i32) {
    %c0_i32 = arith.constant 0 : i32
    %c0_i32_0 = arith.constant 0 : i32
    %c0_i32_1 = arith.constant 0 : i32
    return %c0_i32, %c0_i32_0 : i32, i32
  }
  func.func @transform_2(%arg0: i32) -> (i32, i32) {
    %c0_i32 = arith.constant 0 : i32
    %c0_i32_0 = arith.constant 0 : i32
    %c0_i32_1 = arith.constant 0 : i32
    return %c0_i32, %c0_i32_0 : i32, i32
  }
  func.func @transform_3(%arg0: i32) -> (i32, i32) {
    %c0_i32 = arith.constant 0 : i32
    %c0_i32_0 = arith.constant 0 : i32
    %c0_i32_1 = arith.constant 0 : i32
    return %c0_i32, %c0_i32_0 : i32, i32
  }
  func.func @transform_4(%arg0: i32) -> (i32, i32) {
    %c0_i32 = arith.constant 0 : i32
    %c0_i32_0 = arith.constant 0 : i32
    %c0_i32_1 = arith.constant 0 : i32
    return %c0_i32, %c0_i32_0 : i32, i32
  }
  func.func @transform_5(%arg0: i32) -> (i32, i32) {
    %c0_i32 = arith.constant 0 : i32
    %c0_i32_0 = arith.constant 0 : i32
    %c0_i32_1 = arith.constant 0 : i32
    return %c0_i32, %c0_i32_0 : i32, i32
  }
  func.func @transform_6(%arg0: i32) -> (i32, i32) {
    %c0_i32 = arith.constant 0 : i32
    %c0_i32_0 = arith.constant 0 : i32
    %c0_i32_1 = arith.constant 0 : i32
    return %c0_i32, %c0_i32_0 : i32, i32
  }
  func.func @transform_7(%arg0: i32) -> (i32, i32) {
    %c0_i32 = arith.constant 0 : i32
    %c0_i32_0 = arith.constant 0 : i32
    %c0_i32_1 = arith.constant 0 : i32
    return %c0_i32, %c0_i32_0 : i32, i32
  }
  func.func @transform_8(%arg0: i32) -> (i32, i32) {
    %c0_i32 = arith.constant 0 : i32
    %c0_i32_0 = arith.constant 0 : i32
    %c0_i32_1 = arith.constant 0 : i32
    return %c0_i32, %c0_i32_0 : i32, i32
  }
  func.func @transform_9(%arg0: i32) -> (i32, i32) {
    %c0_i32 = arith.constant 0 : i32
    %c0_i32_0 = arith.constant 0 : i32
    %c0_i32_1 = arith.constant 0 : i32
    return %c0_i32, %c0_i32_0 : i32, i32
  }
  func.func @transform_10(%arg0: i32) -> (i32, i32) {
    %c0_i32 = arith.constant 0 : i32
    %c0_i32_0 = arith.constant 0 : i32
    %c0_i32_1 = arith.constant 0 : i32
    return %c0_i32, %c0_i32_0 : i32, i32
  }
  func.func @transform_11(%arg0: i32) -> (i32, i32) {
    %c0_i32 = arith.constant 0 : i32
    %c0_i32_0 = arith.constant 0 : i32
    return %c0_i32, %arg0 : i32, i32
  }
}

module attributes {stable_mosaic.version = 11 : i64} {
  func.func @mlp_kernel(%arg0: i32, %arg1: memref<256x32xf32, #tpu.memory_space<vmem>>, %arg2: memref<32x256xbf16, #tpu.memory_space<vmem>>, %arg3: memref<1x256xf32, #tpu.memory_space<vmem>>, %arg4: memref<256x128xbf16, #tpu.memory_space<vmem>>, %arg5: memref<1x128xf32, #tpu.memory_space<vmem>>, %arg6: memref<128x128xbf16, #tpu.memory_space<vmem>>, %arg7: memref<1x128xf32, #tpu.memory_space<vmem>>, %arg8: memref<128x128xbf16, #tpu.memory_space<vmem>>, %arg9: memref<1x128xf32, #tpu.memory_space<vmem>>, %arg10: memref<8x128xbf16, #tpu.memory_space<vmem>>, %arg11: memref<8x1xf32, #tpu.memory_space<vmem>>, %arg12: memref<8x256xf32, #tpu.memory_space<vmem>>) attributes {dimension_semantics = [#tpu.dimension_semantics<parallel>], iteration_bounds = array<i64: 1>, scalar_prefetch = 0 : i64, scratch_operands = 0 : i64, tpu.core_type = #tpu.core_type<tc>, window_params = [{transform_indices = @transform_0, window_bounds = array<i64: 256, 32>}, {pipeline_mode = #tpu.pipeline_mode<synchronous>, transform_indices = @transform_1, window_bounds = array<i64: 32, 256>}, {pipeline_mode = #tpu.pipeline_mode<synchronous>, transform_indices = @transform_2, window_bounds = array<i64: 1, 256>}, {pipeline_mode = #tpu.pipeline_mode<synchronous>, transform_indices = @transform_3, window_bounds = array<i64: 256, 128>}, {pipeline_mode = #tpu.pipeline_mode<synchronous>, transform_indices = @transform_4, window_bounds = array<i64: 1, 128>}, {pipeline_mode = #tpu.pipeline_mode<synchronous>, transform_indices = @transform_5, window_bounds = array<i64: 128, 128>}, {pipeline_mode = #tpu.pipeline_mode<synchronous>, transform_indices = @transform_6, window_bounds = array<i64: 1, 128>}, {pipeline_mode = #tpu.pipeline_mode<synchronous>, transform_indices = @transform_7, window_bounds = array<i64: 128, 128>}, {pipeline_mode = #tpu.pipeline_mode<synchronous>, transform_indices = @transform_8, window_bounds = array<i64: 1, 128>}, {pipeline_mode = #tpu.pipeline_mode<synchronous>, transform_indices = @transform_9, window_bounds = array<i64: 8, 128>}, {pipeline_mode = #tpu.pipeline_mode<synchronous>, transform_indices = @transform_10, window_bounds = array<i64: 8, 1>}, {transform_indices = @transform_11, window_bounds = array<i64: 8, 256>}]} {
    %c0 = arith.constant 0 : index
    %c0_0 = arith.constant 0 : index
    %0 = vector.load %arg1[%c0, %c0_0] : memref<256x32xf32, #tpu.memory_space<vmem>>, vector<256x32xf32>
    %1 = arith.truncf %0 : vector<256x32xf32> to vector<256x32xbf16>
    %c0_1 = arith.constant 0 : index
    %c0_2 = arith.constant 0 : index
    %2 = vector.load %arg2[%c0_1, %c0_2] : memref<32x256xbf16, #tpu.memory_space<vmem>>, vector<32x256xbf16>
    %cst = arith.constant dense<0.000000e+00> : vector<256x256xf32>
    %3 = tpu.matmul %1, %2, %cst {dimension_numbers = #tpu.dot_dimension_numbers<[1], [0], [0], [1], [0, 0, 1, 1], [], []>} : vector<256x32xbf16>, vector<32x256xbf16>, vector<256x256xf32> -> vector<256x256xf32>
    %c0_3 = arith.constant 0 : index
    %c0_4 = arith.constant 0 : index
    %4 = vector.load %arg3[%c0_3, %c0_4] : memref<1x256xf32, #tpu.memory_space<vmem>>, vector<1x256xf32>
    %5 = vector.broadcast %4 : vector<1x256xf32> to vector<256x256xf32>
    %6 = arith.addf %3, %5 : vector<256x256xf32>
    %cst_5 = arith.constant 0.000000e+00 : f32
    %7 = vector.broadcast %cst_5 : f32 to vector<256x256xf32>
    %8 = arith.maximumf %6, %7 : vector<256x256xf32>
    %9 = arith.truncf %8 : vector<256x256xf32> to vector<256x256xbf16>
    %c0_6 = arith.constant 0 : index
    %c0_7 = arith.constant 0 : index
    %10 = vector.load %arg4[%c0_6, %c0_7] : memref<256x128xbf16, #tpu.memory_space<vmem>>, vector<256x128xbf16>
    %cst_8 = arith.constant dense<0.000000e+00> : vector<256x128xf32>
    %11 = tpu.matmul %9, %10, %cst_8 {dimension_numbers = #tpu.dot_dimension_numbers<[1], [0], [0], [1], [0, 0, 1, 1], [], []>} : vector<256x256xbf16>, vector<256x128xbf16>, vector<256x128xf32> -> vector<256x128xf32>
    %c0_9 = arith.constant 0 : index
    %c0_10 = arith.constant 0 : index
    %12 = vector.load %arg5[%c0_9, %c0_10] : memref<1x128xf32, #tpu.memory_space<vmem>>, vector<1x128xf32>
    %13 = vector.broadcast %12 : vector<1x128xf32> to vector<256x128xf32>
    %14 = arith.addf %11, %13 : vector<256x128xf32>
    %cst_11 = arith.constant 0.000000e+00 : f32
    %15 = vector.broadcast %cst_11 : f32 to vector<256x128xf32>
    %16 = arith.maximumf %14, %15 : vector<256x128xf32>
    %17 = arith.truncf %16 : vector<256x128xf32> to vector<256x128xbf16>
    %c0_12 = arith.constant 0 : index
    %c0_13 = arith.constant 0 : index
    %18 = vector.load %arg6[%c0_12, %c0_13] : memref<128x128xbf16, #tpu.memory_space<vmem>>, vector<128x128xbf16>
    %cst_14 = arith.constant dense<0.000000e+00> : vector<256x128xf32>
    %19 = tpu.matmul %17, %18, %cst_14 {dimension_numbers = #tpu.dot_dimension_numbers<[1], [0], [0], [1], [0, 0, 1, 1], [], []>} : vector<256x128xbf16>, vector<128x128xbf16>, vector<256x128xf32> -> vector<256x128xf32>
    %c0_15 = arith.constant 0 : index
    %c0_16 = arith.constant 0 : index
    %20 = vector.load %arg7[%c0_15, %c0_16] : memref<1x128xf32, #tpu.memory_space<vmem>>, vector<1x128xf32>
    %21 = vector.broadcast %20 : vector<1x128xf32> to vector<256x128xf32>
    %22 = arith.addf %19, %21 : vector<256x128xf32>
    %cst_17 = arith.constant 0.000000e+00 : f32
    %23 = vector.broadcast %cst_17 : f32 to vector<256x128xf32>
    %24 = arith.maximumf %22, %23 : vector<256x128xf32>
    %25 = arith.truncf %24 : vector<256x128xf32> to vector<256x128xbf16>
    %c0_18 = arith.constant 0 : index
    %c0_19 = arith.constant 0 : index
    %26 = vector.load %arg8[%c0_18, %c0_19] : memref<128x128xbf16, #tpu.memory_space<vmem>>, vector<128x128xbf16>
    %cst_20 = arith.constant dense<0.000000e+00> : vector<256x128xf32>
    %27 = tpu.matmul %25, %26, %cst_20 {dimension_numbers = #tpu.dot_dimension_numbers<[1], [0], [0], [1], [0, 0, 1, 1], [], []>} : vector<256x128xbf16>, vector<128x128xbf16>, vector<256x128xf32> -> vector<256x128xf32>
    %c0_21 = arith.constant 0 : index
    %c0_22 = arith.constant 0 : index
    %28 = vector.load %arg9[%c0_21, %c0_22] : memref<1x128xf32, #tpu.memory_space<vmem>>, vector<1x128xf32>
    %29 = vector.broadcast %28 : vector<1x128xf32> to vector<256x128xf32>
    %30 = arith.addf %27, %29 : vector<256x128xf32>
    %cst_23 = arith.constant 0.000000e+00 : f32
    %31 = vector.broadcast %cst_23 : f32 to vector<256x128xf32>
    %32 = arith.maximumf %30, %31 : vector<256x128xf32>
    %33 = arith.truncf %32 : vector<256x128xf32> to vector<256x128xbf16>
    %c0_24 = arith.constant 0 : index
    %c0_25 = arith.constant 0 : index
    %34 = vector.load %arg10[%c0_24, %c0_25] : memref<8x128xbf16, #tpu.memory_space<vmem>>, vector<8x128xbf16>
    %cst_26 = arith.constant dense<0.000000e+00> : vector<8x256xf32>
    %35 = tpu.matmul %34, %33, %cst_26 {dimension_numbers = #tpu.dot_dimension_numbers<[1], [1], [0], [0], [0, 0, 1, 0], [], []>} : vector<8x128xbf16>, vector<256x128xbf16>, vector<8x256xf32> -> vector<8x256xf32>
    %c0_27 = arith.constant 0 : index
    %c0_28 = arith.constant 0 : index
    %36 = vector.load %arg11[%c0_27, %c0_28] : memref<8x1xf32, #tpu.memory_space<vmem>>, vector<8x1xf32>
    %37 = vector.broadcast %36 : vector<8x1xf32> to vector<8x256xf32>
    %38 = arith.addf %35, %37 : vector<8x256xf32>
    %c0_29 = arith.constant 0 : index
    %c0_30 = arith.constant 0 : index
    %39 = vector.load %arg12[%c0_29, %c0_30] : memref<8x256xf32, #tpu.memory_space<vmem>>, vector<8x256xf32>
    tpu.vector_store %arg12[%c0_29, %c0_30], %38 {strides = array<i32>} : memref<8x256xf32, #tpu.memory_space<vmem>>, vector<8x256xf32>,
    return
  }
  func.func @transform_0(%arg0: i32) -> (i32, i32) {
    %c0_i32 = arith.constant 0 : i32
    %c0_i32_0 = arith.constant 0 : i32
    return %arg0, %c0_i32 : i32, i32
  }
  func.func @transform_1(%arg0: i32) -> (i32, i32) {
    %c0_i32 = arith.constant 0 : i32
    %c0_i32_0 = arith.constant 0 : i32
    %c0_i32_1 = arith.constant 0 : i32
    return %c0_i32, %c0_i32_0 : i32, i32
  }
  func.func @transform_2(%arg0: i32) -> (i32, i32) {
    %c0_i32 = arith.constant 0 : i32
    %c0_i32_0 = arith.constant 0 : i32
    %c0_i32_1 = arith.constant 0 : i32
    return %c0_i32, %c0_i32_0 : i32, i32
  }
  func.func @transform_3(%arg0: i32) -> (i32, i32) {
    %c0_i32 = arith.constant 0 : i32
    %c0_i32_0 = arith.constant 0 : i32
    %c0_i32_1 = arith.constant 0 : i32
    return %c0_i32, %c0_i32_0 : i32, i32
  }
  func.func @transform_4(%arg0: i32) -> (i32, i32) {
    %c0_i32 = arith.constant 0 : i32
    %c0_i32_0 = arith.constant 0 : i32
    %c0_i32_1 = arith.constant 0 : i32
    return %c0_i32, %c0_i32_0 : i32, i32
  }
  func.func @transform_5(%arg0: i32) -> (i32, i32) {
    %c0_i32 = arith.constant 0 : i32
    %c0_i32_0 = arith.constant 0 : i32
    %c0_i32_1 = arith.constant 0 : i32
    return %c0_i32, %c0_i32_0 : i32, i32
  }
  func.func @transform_6(%arg0: i32) -> (i32, i32) {
    %c0_i32 = arith.constant 0 : i32
    %c0_i32_0 = arith.constant 0 : i32
    %c0_i32_1 = arith.constant 0 : i32
    return %c0_i32, %c0_i32_0 : i32, i32
  }
  func.func @transform_7(%arg0: i32) -> (i32, i32) {
    %c0_i32 = arith.constant 0 : i32
    %c0_i32_0 = arith.constant 0 : i32
    %c0_i32_1 = arith.constant 0 : i32
    return %c0_i32, %c0_i32_0 : i32, i32
  }
  func.func @transform_8(%arg0: i32) -> (i32, i32) {
    %c0_i32 = arith.constant 0 : i32
    %c0_i32_0 = arith.constant 0 : i32
    %c0_i32_1 = arith.constant 0 : i32
    return %c0_i32, %c0_i32_0 : i32, i32
  }
  func.func @transform_9(%arg0: i32) -> (i32, i32) {
    %c0_i32 = arith.constant 0 : i32
    %c0_i32_0 = arith.constant 0 : i32
    %c0_i32_1 = arith.constant 0 : i32
    return %c0_i32, %c0_i32_0 : i32, i32
  }
  func.func @transform_10(%arg0: i32) -> (i32, i32) {
    %c0_i32 = arith.constant 0 : i32
    %c0_i32_0 = arith.constant 0 : i32
    %c0_i32_1 = arith.constant 0 : i32
    return %c0_i32, %c0_i32_0 : i32, i32
  }
  func.func @transform_11(%arg0: i32) -> (i32, i32) {
    %c0_i32 = arith.constant 0 : i32
    %c0_i32_0 = arith.constant 0 : i32
    return %c0_i32, %arg0 : i32, i32
  }
}

</mosaic_0001>

<llo_original>
// kernel: tpu_custom_call.1
$region0: #{tpu_custom_call.1}
  #allocation0 [shape = 'u32[]', space=smem, size = 0x4, offset = 0x4, fixed_abs, tag = 'smem constant byte address 0x4 - core index']
  #allocation1 [shape = 'u32[144,128]{1,0:T(1,128)}', space=vmem, size = 0x12000, scoped, tag = 'internal scratch']
  %s0 = inlined_call_operand.vmem [shape: f32[256,32], index: 0, kind: input, shape index: {}]
  %s1 = inlined_call_operand.vmem [shape: bf16[32,256], index: 1, kind: input, shape index: {}]
  %s2 = inlined_call_operand.vmem [shape: f32[1,256], index: 2, kind: input, shape index: {}]
  %s3 = inlined_call_operand.vmem [shape: bf16[256,128], index: 3, kind: input, shape index: {}]
  %s4 = inlined_call_operand.vmem [shape: f32[1,128], index: 4, kind: input, shape index: {}]
  %s5 = inlined_call_operand.vmem [shape: bf16[128,128], index: 5, kind: input, shape index: {}]
  %s6 = inlined_call_operand.vmem [shape: f32[1,128], index: 6, kind: input, shape index: {}]
  %s7 = inlined_call_operand.vmem [shape: bf16[128,128], index: 7, kind: input, shape index: {}]
  %s8 = inlined_call_operand.vmem [shape: f32[1,128], index: 8, kind: input, shape index: {}]
  %s9 = inlined_call_operand.vmem [shape: bf16[8,128], index: 9, kind: input, shape index: {}]
  %s10 = inlined_call_operand.vmem [shape: f32[8,1], index: 10, kind: input, shape index: {}]
  %s11 = inlined_call_operand.hbm [shape: f32[8,256], index: 11, kind: output, shape index: {}]
  %s12 = sld [smem:[#allocation0]]
  $region54: #{tpu_custom_call.1} parent=0
    _
  %s14 = ssub.s32 1, %s12
  %s15 = scalar_select 0, %s14, %s12
  $region1: #{tpu_custom_call.1} parent=0
    #allocation2 [shape = 'u8[8192]{0}', space=vmem, size = 0x2000, scoped, tag = 'output window, operand 0, single buffered']
    #allocation3 [shape = 's32[1]{0}', space=sflag, size = 0x4, scoped, tag = 'scoped memory for tpu_custom_call.1']
    %16 = vsyncpa [#allocation3], 0
    // Predicated region
    $region2: #{tpu_custom_call.1} parent=1 // pred_check
      _
    $region3: #{tpu_custom_call.1} parent=1 // pred_check_branch
      %18 = sbr.rel (0) target = $region5
    $region4: #{tpu_custom_call.1} parent=1 // pred_region
      _
    $region5: #{tpu_custom_call.1} parent=1 // pred_fallthru
      _
    // Predicated region
    $region6: #{tpu_custom_call.1} parent=1 // pred_check
      _
    $region7: #{tpu_custom_call.1} parent=1 // pred_check_branch
      %20 = sbr.rel (0) target = $region9
    $region8: #{tpu_custom_call.1} parent=1 // pred_region
      _
    $region9: #{tpu_custom_call.1} parent=1 // pred_fallthru
      _
    // Predicated region
    $region10: #{tpu_custom_call.1} parent=1 // pred_check
      _
    $region11: #{tpu_custom_call.1} parent=1 // pred_check_branch
      %22 = sbr.rel (0) target = $region13
    $region12: #{tpu_custom_call.1} parent=1 // pred_region
      _
    $region13: #{tpu_custom_call.1} parent=1 // pred_fallthru
      _
    // Predicated region
    $region14: #{tpu_custom_call.1} parent=1 // pred_check
      _
    $region15: #{tpu_custom_call.1} parent=1 // pred_check_branch
      %24 = sbr.rel (0) target = $region17
    $region16: #{tpu_custom_call.1} parent=1 // pred_region
      _
    $region17: #{tpu_custom_call.1} parent=1 // pred_fallthru
      _
    // Predicated region
    $region18: #{tpu_custom_call.1} parent=1 // pred_check
      _
    $region19: #{tpu_custom_call.1} parent=1 // pred_check_branch
      %26 = sbr.rel (0) target = $region21
    $region20: #{tpu_custom_call.1} parent=1 // pred_region
      _
    $region21: #{tpu_custom_call.1} parent=1 // pred_fallthru
      _
    // Predicated region
    $region22: #{tpu_custom_call.1} parent=1 // pred_check
      _
    $region23: #{tpu_custom_call.1} parent=1 // pred_check_branch
      %28 = sbr.rel (0) target = $region25
    $region24: #{tpu_custom_call.1} parent=1 // pred_region
      _
    $region25: #{tpu_custom_call.1} parent=1 // pred_fallthru
      _
    // Predicated region
    $region26: #{tpu_custom_call.1} parent=1 // pred_check
      _
    $region27: #{tpu_custom_call.1} parent=1 // pred_check_branch
      %30 = sbr.rel (0) target = $region29
    $region28: #{tpu_custom_call.1} parent=1 // pred_region
      _
    $region29: #{tpu_custom_call.1} parent=1 // pred_fallthru
      _
    // Predicated region
    $region30: #{tpu_custom_call.1} parent=1 // pred_check
      _
    $region31: #{tpu_custom_call.1} parent=1 // pred_check_branch
      %32 = sbr.rel (0) target = $region33
    $region32: #{tpu_custom_call.1} parent=1 // pred_region
      _
    $region33: #{tpu_custom_call.1} parent=1 // pred_fallthru
      _
    // Predicated region
    $region34: #{tpu_custom_call.1} parent=1 // pred_check
      _
    $region35: #{tpu_custom_call.1} parent=1 // pred_check_branch
      %34 = sbr.rel (0) target = $region37
    $region36: #{tpu_custom_call.1} parent=1 // pred_region
      _
    $region37: #{tpu_custom_call.1} parent=1 // pred_fallthru
      _
    // Predicated region
    $region38: #{tpu_custom_call.1} parent=1 // pred_check
      _
    $region39: #{tpu_custom_call.1} parent=1 // pred_check_branch
      %36 = sbr.rel (0) target = $region41
    $region40: #{tpu_custom_call.1} parent=1 // pred_region
      _
    $region41: #{tpu_custom_call.1} parent=1 // pred_fallthru
      _
    // Predicated region
    $region42: #{tpu_custom_call.1} parent=1 // pred_check
      _
    $region43: #{tpu_custom_call.1} parent=1 // pred_check_branch
      %38 = sbr.rel (0) target = $region45
    $region44: #{tpu_custom_call.1} parent=1 // pred_region
      _
    $region45: #{tpu_custom_call.1} parent=1 // pred_fallthru
      _
    %v40 = vld [vmem:[%s0] sm:$0xff]
    %v41 = vld [vmem:[%s0 + $0x8] sm:$0xff]
    %v42 = vld [vmem:[%s0 + $0x10] sm:$0xff]
    %v43 = vld [vmem:[%s0 + $0x18] sm:$0xff]
    %v44 = vld [vmem:[%s0 + $0x20] sm:$0xff]
    %v45 = vld [vmem:[%s0 + $0x28] sm:$0xff]
    %v46 = vld [vmem:[%s0 + $0x30] sm:$0xff]
    %v47 = vld [vmem:[%s0 + $0x38] sm:$0xff]
    %v48 = vld [vmem:[%s0 + $0x40] sm:$0xff]
    %v49 = vld [vmem:[%s0 + $0x48] sm:$0xff]
    %v50 = vld [vmem:[%s0 + $0x50] sm:$0xff]
    %v51 = vld [vmem:[%s0 + $0x58] sm:$0xff]
    %v52 = vld [vmem:[%s0 + $0x60] sm:$0xff]
    %v53 = vld [vmem:[%s0 + $0x68] sm:$0xff]
    %v54 = vld [vmem:[%s0 + $0x70] sm:$0xff]
    %v55 = vld [vmem:[%s0 + $0x78] sm:$0xff]
    %v56 = vld [vmem:[%s0 + $0x80] sm:$0xff]
    %v57 = vld [vmem:[%s0 + $0x88] sm:$0xff]
    %v58 = vld [vmem:[%s0 + $0x90] sm:$0xff]
    %v59 = vld [vmem:[%s0 + $0x98] sm:$0xff]
    %v60 = vld [vmem:[%s0 + $0xa0] sm:$0xff]
    %v61 = vld [vmem:[%s0 + $0xa8] sm:$0xff]
    %v62 = vld [vmem:[%s0 + $0xb0] sm:$0xff]
    %v63 = vld [vmem:[%s0 + $0xb8] sm:$0xff]
    %v64 = vld [vmem:[%s0 + $0xc0] sm:$0xff]
    %v65 = vld [vmem:[%s0 + $0xc8] sm:$0xff]
    %v66 = vld [vmem:[%s0 + $0xd0] sm:$0xff]
    %v67 = vld [vmem:[%s0 + $0xd8] sm:$0xff]
    %v68 = vld [vmem:[%s0 + $0xe0] sm:$0xff]
    %v69 = vld [vmem:[%s0 + $0xe8] sm:$0xff]
    %v70 = vld [vmem:[%s0 + $0xf0] sm:$0xff]
    %v71 = vld [vmem:[%s0 + $0xf8] sm:$0xff]
    %v72 = vpack.c.bf16 %v41, %v40
    %v73 = vpack.c.bf16 %v43, %v42
    %v74 = vpack.c.bf16 %v45, %v44
    %v75 = vpack.c.bf16 %v47, %v46
    %v76 = vpack.c.bf16 %v49, %v48
    %v77 = vpack.c.bf16 %v51, %v50
    %v78 = vpack.c.bf16 %v53, %v52
    %v79 = vpack.c.bf16 %v55, %v54
    %v80 = vpack.c.bf16 %v57, %v56
    %v81 = vpack.c.bf16 %v59, %v58
    %v82 = vpack.c.bf16 %v61, %v60
    %v83 = vpack.c.bf16 %v63, %v62
    %v84 = vpack.c.bf16 %v65, %v64
    %v85 = vpack.c.bf16 %v67, %v66
    %v86 = vpack.c.bf16 %v69, %v68
    %v87 = vpack.c.bf16 %v71, %v70
    %v88 = vld [vmem:[%s1] sm:$0xff]
    %v89 = vld [vmem:[%s1 + $0x8] sm:$0xff]
    %v90 = vld [vmem:[%s1 + $0x10] sm:$0xff]
    %v91 = vld [vmem:[%s1 + $0x18] sm:$0xff]
    %v92 = vld [vmem:[%s2] sm:$0x3]
    %v94 = vlaneseq
    %v95 = vshrl.u32 %v94, 7
    %v96 = vsub.s32 0, %v95
    %v97 = vrot.slane %v92, %v96
    %v98 = vlaneseq
    %v99 = vshrl.u32 %v98, 7
    %v100 = vsub.s32 1, %v99
    %v101 = vrot.slane %v92, %v100
    %v108 = vunpack.c.l.b16 %v88
    %v109 = vunpack.c.h.b16 %v88
    %v110 = vunpack.c.l.b16 %v89
    %v111 = vunpack.c.h.b16 %v89
    %v112 = vunpack.c.l.b16 %v90
    %v113 = vunpack.c.h.b16 %v90
    %v114 = vunpack.c.l.b16 %v91
    %v115 = vunpack.c.h.b16 %v91
    %v116 = vpack.c.b16 %v110, %v108
    %v117 = vpack.c.b16 %v111, %v109
    %v118 = vpack.c.b16 %v114, %v112
    %v119 = vpack.c.b16 %v115, %v113
    %vm124 = vcmask 261120
    %v126 = vsel %vm124, %v72, 0
    %v129 = vsel %vm124, %v73, 0
    %v132 = vsel %vm124, %v74, 0
    %v135 = vsel %vm124, %v75, 0
    %v138 = vsel %vm124, %v76, 0
    %v141 = vsel %vm124, %v77, 0
    %v144 = vsel %vm124, %v78, 0
    %v147 = vsel %vm124, %v79, 0
    %v150 = vsel %vm124, %v80, 0
    %v153 = vsel %vm124, %v81, 0
    %v156 = vsel %vm124, %v82, 0
    %v159 = vsel %vm124, %v83, 0
    %v162 = vsel %vm124, %v84, 0
    %v165 = vsel %vm124, %v85, 0
    %v168 = vsel %vm124, %v86, 0
    %v171 = vsel %vm124, %v87, 0
    %173 = vmatprep.subr.bf16.mxu0 0
    %174 = vmatpush1.bf16.msra.mxu0 0
    %175 = vmatprep.subr.bf16.mxu0 0
    %176 = vmatpush1.bf16.msra.mxu0 0
    %177 = vmatprep.subr.bf16.mxu0 0
    %178 = vmatpush1.bf16.msra.mxu0 0
    %179 = vmatprep.subr.bf16.mxu0 0
    %180 = vmatpush1.bf16.msra.mxu0 0
    %181 = vmatprep.subr.bf16.mxu0 0
    %182 = vmatpush1.bf16.msra.mxu0 0
    %183 = vmatprep.subr.bf16.mxu0 0
    %184 = vmatpush1.bf16.msra.mxu0 0
    %185 = vmatprep.subr.bf16.mxu0 %v119
    %186 = vmatpush1.bf16.msra.mxu0 %v118
    %187 = vmatprep.subr.bf16.mxu0 %v117
    %188 = vmatpush1.bf16.msra.mxu0 %v116
    %189 = vmatprep.subr.bf16.mxu0 0
    %190 = vmatpush2.bf16.msra.mxu0 0
    %191 = vmatprep.subr.bf16.mxu0 0
    %192 = vmatpush2.bf16.msra.mxu0 0
    %193 = vmatprep.subr.bf16.mxu0 0
    %194 = vmatpush2.bf16.msra.mxu0 0
    %195 = vmatprep.subr.bf16.mxu0 0
    %196 = vmatpush2.bf16.msra.mxu0 0
    %197 = vmatprep.subr.bf16.mxu0 0
    %198 = vmatpush2.bf16.msra.mxu0 0
    %199 = vmatprep.subr.bf16.mxu0 0
    %200 = vmatpush2.bf16.msra.mxu0 0
    %201 = vmatprep.subr.bf16.mxu0 0
    %202 = vmatpush2.bf16.msra.mxu0 0
    %203 = vmatprep.subr.bf16.mxu0 0
    %204 = vmatpush2.bf16.msra.mxu0 0
    %205 = vmatprep.mubr.bf16.mxu0 0
    %206 = vmatmul.mubr.bf16.gmra.mxu0 %v126
    %v207 = vpop.f32.mrf.mxu0
    %v208 = vadd.f32 %v97, %v207
    %v209 = vpop.f32.mrf.mxu0
    %v210 = vadd.f32 %v101, %v209
    %v211 = vpop.f32.mrf.mxu0
    %v212 = vadd.f32 %v97, %v211
    %v213 = vpop.f32.mrf.mxu0
    %v214 = vadd.f32 %v101, %v213
    %215 = vmatprep.mubr.bf16.mxu0 0
    %216 = vmatmul.mubr.bf16.gmra.mxu0 %v129
    %v217 = vpop.f32.mrf.mxu0
    %v218 = vadd.f32 %v97, %v217
    %v219 = vpop.f32.mrf.mxu0
    %v220 = vadd.f32 %v101, %v219
    %v221 = vpop.f32.mrf.mxu0
    %v222 = vadd.f32 %v97, %v221
    %v223 = vpop.f32.mrf.mxu0
    %v224 = vadd.f32 %v101, %v223
    %225 = vmatprep.mubr.bf16.mxu0 0
    %226 = vmatmul.mubr.bf16.gmra.mxu0 %v132
    %v227 = vpop.f32.mrf.mxu0
    %v228 = vadd.f32 %v97, %v227
    %v229 = vpop.f32.mrf.mxu0
    %v230 = vadd.f32 %v101, %v229
    %v231 = vpop.f32.mrf.mxu0
    %v232 = vadd.f32 %v97, %v231
    %v233 = vpop.f32.mrf.mxu0
    %v234 = vadd.f32 %v101, %v233
    %235 = vmatprep.mubr.bf16.mxu0 0
    %236 = vmatmul.mubr.bf16.gmra.mxu0 %v135
    %v237 = vpop.f32.mrf.mxu0
    %v238 = vadd.f32 %v97, %v237
    %v239 = vpop.f32.mrf.mxu0
    %v240 = vadd.f32 %v101, %v239
    %v241 = vpop.f32.mrf.mxu0
    %v242 = vadd.f32 %v97, %v241
    %v243 = vpop.f32.mrf.mxu0
    %v244 = vadd.f32 %v101, %v243
    %245 = vmatprep.mubr.bf16.mxu0 0
    %246 = vmatmul.mubr.bf16.gmra.mxu0 %v138
    %v247 = vpop.f32.mrf.mxu0
    %v248 = vadd.f32 %v97, %v247
    %v249 = vpop.f32.mrf.mxu0
    %v250 = vadd.f32 %v101, %v249
    %v251 = vpop.f32.mrf.mxu0
    %v252 = vadd.f32 %v97, %v251
    %v253 = vpop.f32.mrf.mxu0
    %v254 = vadd.f32 %v101, %v253
    %255 = vmatprep.mubr.bf16.mxu0 0
    %256 = vmatmul.mubr.bf16.gmra.mxu0 %v141
    %v257 = vpop.f32.mrf.mxu0
    %v258 = vadd.f32 %v97, %v257
    %v259 = vpop.f32.mrf.mxu0
    %v260 = vadd.f32 %v101, %v259
    %v261 = vpop.f32.mrf.mxu0
    %v262 = vadd.f32 %v97, %v261
    %v263 = vpop.f32.mrf.mxu0
    %v264 = vadd.f32 %v101, %v263
    %265 = vmatprep.mubr.bf16.mxu0 0
    %266 = vmatmul.mubr.bf16.gmra.mxu0 %v144
    %v267 = vpop.f32.mrf.mxu0
    %v268 = vadd.f32 %v97, %v267
    %v269 = vpop.f32.mrf.mxu0
    %v270 = vadd.f32 %v101, %v269
    %v271 = vpop.f32.mrf.mxu0
    %v272 = vadd.f32 %v97, %v271
    %v273 = vpop.f32.mrf.mxu0
    %v274 = vadd.f32 %v101, %v273
    %275 = vmatprep.mubr.bf16.mxu0 0
    %276 = vmatmul.mubr.bf16.gmra.mxu0 %v147
    %v277 = vpop.f32.mrf.mxu0
    %v278 = vadd.f32 %v97, %v277
    %v279 = vpop.f32.mrf.mxu0
    %v280 = vadd.f32 %v101, %v279
    %v281 = vpop.f32.mrf.mxu0
    %v282 = vadd.f32 %v97, %v281
    %v283 = vpop.f32.mrf.mxu0
    %v284 = vadd.f32 %v101, %v283
    %285 = vmatprep.mubr.bf16.mxu0 0
    %286 = vmatmul.mubr.bf16.gmra.mxu0 %v150
    %v287 = vpop.f32.mrf.mxu0
    %v288 = vadd.f32 %v97, %v287
    %v289 = vpop.f32.mrf.mxu0
    %v290 = vadd.f32 %v101, %v289
    %v291 = vpop.f32.mrf.mxu0
    %v292 = vadd.f32 %v97, %v291
    %v293 = vpop.f32.mrf.mxu0
    %v294 = vadd.f32 %v101, %v293
    %295 = vmatprep.mubr.bf16.mxu0 0
    %296 = vmatmul.mubr.bf16.gmra.mxu0 %v153
    %v297 = vpop.f32.mrf.mxu0
    %v298 = vadd.f32 %v97, %v297
    %v299 = vpop.f32.mrf.mxu0
    %v300 = vadd.f32 %v101, %v299
    %v301 = vpop.f32.mrf.mxu0
    %v302 = vadd.f32 %v97, %v301
    %v303 = vpop.f32.mrf.mxu0
    %v304 = vadd.f32 %v101, %v303
    %305 = vmatprep.mubr.bf16.mxu0 0
    %306 = vmatmul.mubr.bf16.gmra.mxu0 %v156
    %v307 = vpop.f32.mrf.mxu0
    %v308 = vadd.f32 %v97, %v307
    %v309 = vpop.f32.mrf.mxu0
    %v310 = vadd.f32 %v101, %v309
    %v311 = vpop.f32.mrf.mxu0
    %v312 = vadd.f32 %v97, %v311
    %v313 = vpop.f32.mrf.mxu0
    %v314 = vadd.f32 %v101, %v313
    %315 = vmatprep.mubr.bf16.mxu0 0
    %316 = vmatmul.mubr.bf16.gmra.mxu0 %v159
    %v317 = vpop.f32.mrf.mxu0
    %v318 = vadd.f32 %v97, %v317
    %v319 = vpop.f32.mrf.mxu0
    %v320 = vadd.f32 %v101, %v319
    %v321 = vpop.f32.mrf.mxu0
    %v322 = vadd.f32 %v97, %v321
    %v323 = vpop.f32.mrf.mxu0
    %v324 = vadd.f32 %v101, %v323
    %325 = vmatprep.mubr.bf16.mxu0 0
    %326 = vmatmul.mubr.bf16.gmra.mxu0 %v162
    %v327 = vpop.f32.mrf.mxu0
    %v328 = vadd.f32 %v97, %v327
    %v329 = vpop.f32.mrf.mxu0
    %v330 = vadd.f32 %v101, %v329
    %v331 = vpop.f32.mrf.mxu0
    %v332 = vadd.f32 %v97, %v331
    %v333 = vpop.f32.mrf.mxu0
    %v334 = vadd.f32 %v101, %v333
    %335 = vmatprep.mubr.bf16.mxu0 0
    %336 = vmatmul.mubr.bf16.gmra.mxu0 %v165
    %v337 = vpop.f32.mrf.mxu0
    %v338 = vadd.f32 %v97, %v337
    %v339 = vpop.f32.mrf.mxu0
    %v340 = vadd.f32 %v101, %v339
    %v341 = vpop.f32.mrf.mxu0
    %v342 = vadd.f32 %v97, %v341
    %v343 = vpop.f32.mrf.mxu0
    %v344 = vadd.f32 %v101, %v343
    %345 = vmatprep.mubr.bf16.mxu0 0
    %346 = vmatmul.mubr.bf16.gmra.mxu0 %v168
    %v347 = vpop.f32.mrf.mxu0
    %v348 = vadd.f32 %v97, %v347
    %v349 = vpop.f32.mrf.mxu0
    %v350 = vadd.f32 %v101, %v349
    %v351 = vpop.f32.mrf.mxu0
    %v352 = vadd.f32 %v97, %v351
    %v353 = vpop.f32.mrf.mxu0
    %v354 = vadd.f32 %v101, %v353
    %355 = vmatprep.mubr.bf16.mxu0 0
    %356 = vmatmul.mubr.bf16.gmra.mxu0 %v171
    %v357 = vpop.f32.mrf.mxu0
    %v358 = vadd.f32 %v97, %v357
    %v359 = vpop.f32.mrf.mxu0
    %v360 = vadd.f32 %v101, %v359
    %v361 = vpop.f32.mrf.mxu0
    %v362 = vadd.f32 %v97, %v361
    %v363 = vpop.f32.mrf.mxu0
    %v364 = vadd.f32 %v101, %v363
    %365 = vdwg.mxu0
    %v366 = vmax.f32 %v208, 0.0
    %v367 = vmax.f32 %v210, 0.0
    %v368 = vmax.f32 %v212, 0.0
    %v369 = vmax.f32 %v214, 0.0
    %v370 = vmax.f32 %v218, 0.0
    %v371 = vmax.f32 %v220, 0.0
    %v372 = vmax.f32 %v222, 0.0
    %v373 = vmax.f32 %v224, 0.0
    %v374 = vmax.f32 %v228, 0.0
    %v375 = vmax.f32 %v230, 0.0
    %v376 = vmax.f32 %v232, 0.0
    %v377 = vmax.f32 %v234, 0.0
    %v378 = vmax.f32 %v238, 0.0
    %v379 = vmax.f32 %v240, 0.0
    %v380 = vmax.f32 %v242, 0.0
    %v381 = vmax.f32 %v244, 0.0
    %v382 = vmax.f32 %v248, 0.0
    %v383 = vmax.f32 %v250, 0.0
    %v384 = vmax.f32 %v252, 0.0
    %v385 = vmax.f32 %v254, 0.0
    %v386 = vmax.f32 %v258, 0.0
    %v387 = vmax.f32 %v260, 0.0
    %v388 = vmax.f32 %v262, 0.0
    %v389 = vmax.f32 %v264, 0.0
    %v390 = vmax.f32 %v268, 0.0
    %v391 = vmax.f32 %v270, 0.0
    %v392 = vmax.f32 %v272, 0.0
    %v393 = vmax.f32 %v274, 0.0
    %v394 = vmax.f32 %v278, 0.0
    %v395 = vmax.f32 %v280, 0.0
    %v396 = vmax.f32 %v282, 0.0
    %v397 = vmax.f32 %v284, 0.0
    %v398 = vmax.f32 %v288, 0.0
    %v399 = vmax.f32 %v290, 0.0
    %v400 = vmax.f32 %v292, 0.0
    %v401 = vmax.f32 %v294, 0.0
    %v402 = vmax.f32 %v298, 0.0
    %v403 = vmax.f32 %v300, 0.0
    %v404 = vmax.f32 %v302, 0.0
    %v405 = vmax.f32 %v304, 0.0
    %v406 = vmax.f32 %v308, 0.0
    %v407 = vmax.f32 %v310, 0.0
    %v408 = vmax.f32 %v312, 0.0
    %v409 = vmax.f32 %v314, 0.0
    %v410 = vmax.f32 %v318, 0.0
    %v411 = vmax.f32 %v320, 0.0
    %v412 = vmax.f32 %v322, 0.0
    %v413 = vmax.f32 %v324, 0.0
    %v414 = vmax.f32 %v328, 0.0
    %v415 = vmax.f32 %v330, 0.0
    %v416 = vmax.f32 %v332, 0.0
    %v417 = vmax.f32 %v334, 0.0
    %v418 = vmax.f32 %v338, 0.0
    %v419 = vmax.f32 %v340, 0.0
    %v420 = vmax.f32 %v342, 0.0
    %v421 = vmax.f32 %v344, 0.0
    %v422 = vmax.f32 %v348, 0.0
    %v423 = vmax.f32 %v350, 0.0
    %v424 = vmax.f32 %v352, 0.0
    %v425 = vmax.f32 %v354, 0.0
    %v426 = vmax.f32 %v358, 0.0
    %v427 = vmax.f32 %v360, 0.0
    %v428 = vmax.f32 %v362, 0.0
    %v429 = vmax.f32 %v364, 0.0
    %v430 = vpack.c.bf16 %v368, %v366
    %v431 = vpack.c.bf16 %v369, %v367
    %v432 = vpack.c.bf16 %v372, %v370
    %v433 = vpack.c.bf16 %v373, %v371
    %v434 = vpack.c.bf16 %v376, %v374
    %v435 = vpack.c.bf16 %v377, %v375
    %v436 = vpack.c.bf16 %v380, %v378
    %v437 = vpack.c.bf16 %v381, %v379
    %v438 = vpack.c.bf16 %v384, %v382
    %v439 = vpack.c.bf16 %v385, %v383
    %v440 = vpack.c.bf16 %v388, %v386
    %v441 = vpack.c.bf16 %v389, %v387
    %v442 = vpack.c.bf16 %v392, %v390
    %v443 = vpack.c.bf16 %v393, %v391
    %v444 = vpack.c.bf16 %v396, %v394
    %v445 = vpack.c.bf16 %v397, %v395
    %v446 = vpack.c.bf16 %v400, %v398
    %v447 = vpack.c.bf16 %v401, %v399
    %v448 = vpack.c.bf16 %v404, %v402
    %v449 = vpack.c.bf16 %v405, %v403
    %v450 = vpack.c.bf16 %v408, %v406
    %v451 = vpack.c.bf16 %v409, %v407
    %v452 = vpack.c.bf16 %v412, %v410
    %v453 = vpack.c.bf16 %v413, %v411
    %v454 = vpack.c.bf16 %v416, %v414
    %v455 = vpack.c.bf16 %v417, %v415
    %v456 = vpack.c.bf16 %v420, %v418
    %v457 = vpack.c.bf16 %v421, %v419
    %v458 = vpack.c.bf16 %v424, %v422
    %v459 = vpack.c.bf16 %v425, %v423
    %v460 = vpack.c.bf16 %v428, %v426
    %v461 = vpack.c.bf16 %v429, %v427
    %v462 = vld [vmem:[%s3] sm:$0xf]
    %v463 = vld [vmem:[%s3 + $0x4] sm:$0xf]
    %v464 = vld [vmem:[%s3 + $0x8] sm:$0xf]
    %v465 = vld [vmem:[%s3 + $0xc] sm:$0xf]
    %v466 = vld [vmem:[%s3 + $0x10] sm:$0xf]
    %v467 = vld [vmem:[%s3 + $0x14] sm:$0xf]
    %v468 = vld [vmem:[%s3 + $0x18] sm:$0xf]
    %v469 = vld [vmem:[%s3 + $0x1c] sm:$0xf]
    %v470 = vld [vmem:[%s3 + $0x20] sm:$0xf]
    %v471 = vld [vmem:[%s3 + $0x24] sm:$0xf]
    %v472 = vld [vmem:[%s3 + $0x28] sm:$0xf]
    %v473 = vld [vmem:[%s3 + $0x2c] sm:$0xf]
    %v474 = vld [vmem:[%s3 + $0x30] sm:$0xf]
    %v475 = vld [vmem:[%s3 + $0x34] sm:$0xf]
    %v476 = vld [vmem:[%s3 + $0x38] sm:$0xf]
    %v477 = vld [vmem:[%s3 + $0x3c] sm:$0xf]
    %v478 = vld [vmem:[%s3 + $0x40] sm:$0xf]
    %v479 = vld [vmem:[%s3 + $0x44] sm:$0xf]
    %v480 = vld [vmem:[%s3 + $0x48] sm:$0xf]
    %v481 = vld [vmem:[%s3 + $0x4c] sm:$0xf]
    %v482 = vld [vmem:[%s3 + $0x50] sm:$0xf]
    %v483 = vld [vmem:[%s3 + $0x54] sm:$0xf]
    %v484 = vld [vmem:[%s3 + $0x58] sm:$0xf]
    %v485 = vld [vmem:[%s3 + $0x5c] sm:$0xf]
    %v486 = vld [vmem:[%s3 + $0x60] sm:$0xf]
    %v487 = vld [vmem:[%s3 + $0x64] sm:$0xf]
    %v488 = vld [vmem:[%s3 + $0x68] sm:$0xf]
    %v489 = vld [vmem:[%s3 + $0x6c] sm:$0xf]
    %v490 = vld [vmem:[%s3 + $0x70] sm:$0xf]
    %v491 = vld [vmem:[%s3 + $0x74] sm:$0xf]
    %v492 = vld [vmem:[%s3 + $0x78] sm:$0xf]
    %v493 = vld [vmem:[%s3 + $0x7c] sm:$0xf]
    %v494 = vld [vmem:[%s4] sm:$0x1]
    %v496 = vlaneseq
    %v497 = vshrl.u32 %v496, 7
    %v498 = vsub.s32 0, %v497
    %v499 = vrot.slane %v494, %v498
    %v533 = vunpack.c.l.b16 %v462
    %v534 = vunpack.c.l.b16 %v463
    %v535 = vunpack.c.l.b16 %v464
    %v536 = vunpack.c.l.b16 %v465
    %v537 = vunpack.c.l.b16 %v466
    %v538 = vunpack.c.l.b16 %v467
    %v539 = vunpack.c.l.b16 %v468
    %v540 = vunpack.c.l.b16 %v469
    %v541 = vunpack.c.l.b16 %v470
    %v542 = vunpack.c.l.b16 %v471
    %v543 = vunpack.c.l.b16 %v472
    %v544 = vunpack.c.l.b16 %v473
    %v545 = vunpack.c.l.b16 %v474
    %v546 = vunpack.c.l.b16 %v475
    %v547 = vunpack.c.l.b16 %v476
    %v548 = vunpack.c.l.b16 %v477
    %v549 = vunpack.c.l.b16 %v478
    %v550 = vunpack.c.l.b16 %v479
    %v551 = vunpack.c.l.b16 %v480
    %v552 = vunpack.c.l.b16 %v481
    %v553 = vunpack.c.l.b16 %v482
    %v554 = vunpack.c.l.b16 %v483
    %v555 = vunpack.c.l.b16 %v484
    %v556 = vunpack.c.l.b16 %v485
    %v557 = vunpack.c.l.b16 %v486
    %v558 = vunpack.c.l.b16 %v487
    %v559 = vunpack.c.l.b16 %v488
    %v560 = vunpack.c.l.b16 %v489
    %v561 = vunpack.c.l.b16 %v490
    %v562 = vunpack.c.l.b16 %v491
    %v563 = vunpack.c.l.b16 %v492
    %v564 = vunpack.c.l.b16 %v493
    %v565 = vpack.c.b16 %v534, %v533
    %v566 = vpack.c.b16 %v536, %v535
    %v567 = vpack.c.b16 %v538, %v537
    %v568 = vpack.c.b16 %v540, %v539
    %v569 = vpack.c.b16 %v542, %v541
    %v570 = vpack.c.b16 %v544, %v543
    %v571 = vpack.c.b16 %v546, %v545
    %v572 = vpack.c.b16 %v548, %v547
    %v573 = vpack.c.b16 %v550, %v549
    %v574 = vpack.c.b16 %v552, %v551
    %v575 = vpack.c.b16 %v554, %v553
    %v576 = vpack.c.b16 %v556, %v555
    %v577 = vpack.c.b16 %v558, %v557
    %v578 = vpack.c.b16 %v560, %v559
    %v579 = vpack.c.b16 %v562, %v561
    %v580 = vpack.c.b16 %v564, %v563
    %597 = vmatprep.subr.bf16.mxu0 0
    %598 = vmatpush1.bf16.msra.mxu0 %v572
    %599 = vmatprep.subr.bf16.mxu0 0
    %600 = vmatpush1.bf16.msra.mxu0 %v571
    %601 = vmatprep.subr.bf16.mxu0 0
    %602 = vmatpush1.bf16.msra.mxu0 %v570
    %603 = vmatprep.subr.bf16.mxu0 0
    %604 = vmatpush1.bf16.msra.mxu0 %v569
    %605 = vmatprep.subr.bf16.mxu0 0
    %606 = vmatpush1.bf16.msra.mxu0 %v568
    %607 = vmatprep.subr.bf16.mxu0 0
    %608 = vmatpush1.bf16.msra.mxu0 %v567
    %609 = vmatprep.subr.bf16.mxu0 0
    %610 = vmatpush1.bf16.msra.mxu0 %v566
    %611 = vmatprep.subr.bf16.mxu0 0
    %612 = vmatpush1.bf16.msra.mxu0 %v565
    %613 = vmatprep.subr.bf16.mxu0 0
    %614 = vmatpush2.bf16.msra.mxu0 %v580
    %615 = vmatprep.subr.bf16.mxu0 0
    %616 = vmatpush2.bf16.msra.mxu0 %v579
    %617 = vmatprep.subr.bf16.mxu0 0
    %618 = vmatpush2.bf16.msra.mxu0 %v578
    %619 = vmatprep.subr.bf16.mxu0 0
    %620 = vmatpush2.bf16.msra.mxu0 %v577
    %621 = vmatprep.subr.bf16.mxu0 0
    %622 = vmatpush2.bf16.msra.mxu0 %v576
    %623 = vmatprep.subr.bf16.mxu0 0
    %624 = vmatpush2.bf16.msra.mxu0 %v575
    %625 = vmatprep.subr.bf16.mxu0 0
    %626 = vmatpush2.bf16.msra.mxu0 %v574
    %627 = vmatprep.subr.bf16.mxu0 0
    %628 = vmatpush2.bf16.msra.mxu0 %v573
    %629 = vmatprep.mubr.bf16.mxu0 %v431
    %630 = vmatmul.mubr.bf16.gmra.mxu0 %v430
    %v631 = vpop.f32.mrf.mxu0
    %v632 = vadd.f32 %v499, %v631
    %v633 = vpop.f32.mrf.mxu0
    %v634 = vpop.f32.mrf.mxu0
    %v635 = vadd.f32 %v499, %v634
    %v636 = vpop.f32.mrf.mxu0
    %637 = vmatprep.mubr.bf16.mxu0 %v433
    %638 = vmatmul.mubr.bf16.gmra.mxu0 %v432
    %v639 = vpop.f32.mrf.mxu0
    %v640 = vadd.f32 %v499, %v639
    %v641 = vpop.f32.mrf.mxu0
    %v642 = vpop.f32.mrf.mxu0
    %v643 = vadd.f32 %v499, %v642
    %v644 = vpop.f32.mrf.mxu0
    %645 = vmatprep.mubr.bf16.mxu0 %v435
    %646 = vmatmul.mubr.bf16.gmra.mxu0 %v434
    %v647 = vpop.f32.mrf.mxu0
    %v648 = vadd.f32 %v499, %v647
    %v649 = vpop.f32.mrf.mxu0
    %v650 = vpop.f32.mrf.mxu0
    %v651 = vadd.f32 %v499, %v650
    %v652 = vpop.f32.mrf.mxu0
    %653 = vmatprep.mubr.bf16.mxu0 %v437
    %654 = vmatmul.mubr.bf16.gmra.mxu0 %v436
    %v655 = vpop.f32.mrf.mxu0
    %v656 = vadd.f32 %v499, %v655
    %v657 = vpop.f32.mrf.mxu0
    %v658 = vpop.f32.mrf.mxu0
    %v659 = vadd.f32 %v499, %v658
    %v660 = vpop.f32.mrf.mxu0
    %661 = vmatprep.mubr.bf16.mxu0 %v439
    %662 = vmatmul.mubr.bf16.gmra.mxu0 %v438
    %v663 = vpop.f32.mrf.mxu0
    %v664 = vadd.f32 %v499, %v663
    %v665 = vpop.f32.mrf.mxu0
    %v666 = vpop.f32.mrf.mxu0
    %v667 = vadd.f32 %v499, %v666
    %v668 = vpop.f32.mrf.mxu0
    %669 = vmatprep.mubr.bf16.mxu0 %v441
    %670 = vmatmul.mubr.bf16.gmra.mxu0 %v440
    %v671 = vpop.f32.mrf.mxu0
    %v672 = vadd.f32 %v499, %v671
    %v673 = vpop.f32.mrf.mxu0
    %v674 = vpop.f32.mrf.mxu0
    %v675 = vadd.f32 %v499, %v674
    %v676 = vpop.f32.mrf.mxu0
    %677 = vmatprep.mubr.bf16.mxu0 %v443
    %678 = vmatmul.mubr.bf16.gmra.mxu0 %v442
    %v679 = vpop.f32.mrf.mxu0
    %v680 = vadd.f32 %v499, %v679
    %v681 = vpop.f32.mrf.mxu0
    %v682 = vpop.f32.mrf.mxu0
    %v683 = vadd.f32 %v499, %v682
    %v684 = vpop.f32.mrf.mxu0
    %685 = vmatprep.mubr.bf16.mxu0 %v445
    %686 = vmatmul.mubr.bf16.gmra.mxu0 %v444
    %v687 = vpop.f32.mrf.mxu0
    %v688 = vadd.f32 %v499, %v687
    %v689 = vpop.f32.mrf.mxu0
    %v690 = vpop.f32.mrf.mxu0
    %v691 = vadd.f32 %v499, %v690
    %v692 = vpop.f32.mrf.mxu0
    %693 = vmatprep.mubr.bf16.mxu0 %v447
    %694 = vmatmul.mubr.bf16.gmra.mxu0 %v446
    %v695 = vpop.f32.mrf.mxu0
    %v696 = vadd.f32 %v499, %v695
    %v697 = vpop.f32.mrf.mxu0
    %v698 = vpop.f32.mrf.mxu0
    %v699 = vadd.f32 %v499, %v698
    %v700 = vpop.f32.mrf.mxu0
    %701 = vmatprep.mubr.bf16.mxu0 %v449
    %702 = vmatmul.mubr.bf16.gmra.mxu0 %v448
    %v703 = vpop.f32.mrf.mxu0
    %v704 = vadd.f32 %v499, %v703
    %v705 = vpop.f32.mrf.mxu0
    %v706 = vpop.f32.mrf.mxu0
    %v707 = vadd.f32 %v499, %v706
    %v708 = vpop.f32.mrf.mxu0
    %709 = vmatprep.mubr.bf16.mxu0 %v451
    %710 = vmatmul.mubr.bf16.gmra.mxu0 %v450
    %v711 = vpop.f32.mrf.mxu0
    %v712 = vadd.f32 %v499, %v711
    %v713 = vpop.f32.mrf.mxu0
    %v714 = vpop.f32.mrf.mxu0
    %v715 = vadd.f32 %v499, %v714
    %v716 = vpop.f32.mrf.mxu0
    %717 = vmatprep.mubr.bf16.mxu0 %v453
    %718 = vmatmul.mubr.bf16.gmra.mxu0 %v452
    %v719 = vpop.f32.mrf.mxu0
    %v720 = vadd.f32 %v499, %v719
    %v721 = vpop.f32.mrf.mxu0
    %v722 = vpop.f32.mrf.mxu0
    %v723 = vadd.f32 %v499, %v722
    %v724 = vpop.f32.mrf.mxu0
    %725 = vmatprep.mubr.bf16.mxu0 %v455
    %726 = vmatmul.mubr.bf16.gmra.mxu0 %v454
    %v727 = vpop.f32.mrf.mxu0
    %v728 = vadd.f32 %v499, %v727
    %v729 = vpop.f32.mrf.mxu0
    %v730 = vpop.f32.mrf.mxu0
    %v731 = vadd.f32 %v499, %v730
    %v732 = vpop.f32.mrf.mxu0
    %733 = vmatprep.mubr.bf16.mxu0 %v457
    %734 = vmatmul.mubr.bf16.gmra.mxu0 %v456
    %v735 = vpop.f32.mrf.mxu0
    %v736 = vadd.f32 %v499, %v735
    %v737 = vpop.f32.mrf.mxu0
    %v738 = vpop.f32.mrf.mxu0
    %v739 = vadd.f32 %v499, %v738
    %v740 = vpop.f32.mrf.mxu0
    %741 = vmatprep.mubr.bf16.mxu0 %v459
    %742 = vmatmul.mubr.bf16.gmra.mxu0 %v458
    %v743 = vpop.f32.mrf.mxu0
    %v744 = vadd.f32 %v499, %v743
    %v745 = vpop.f32.mrf.mxu0
    %v746 = vpop.f32.mrf.mxu0
    %v747 = vadd.f32 %v499, %v746
    %v748 = vpop.f32.mrf.mxu0
    %749 = vmatprep.mubr.bf16.mxu0 %v461
    %750 = vmatmul.mubr.bf16.gmra.mxu0 %v460
    %v751 = vpop.f32.mrf.mxu0
    %v752 = vadd.f32 %v499, %v751
    %v753 = vpop.f32.mrf.mxu0
    %v754 = vpop.f32.mrf.mxu0
    %v755 = vadd.f32 %v499, %v754
    %v756 = vpop.f32.mrf.mxu0
    %757 = vdwg.mxu0
    %v758 = vmax.f32 %v632, 0.0
    %v759 = vmax.f32 %v635, 0.0
    %v760 = vmax.f32 %v640, 0.0
    %v761 = vmax.f32 %v643, 0.0
    %v762 = vmax.f32 %v648, 0.0
    %v763 = vmax.f32 %v651, 0.0
    %v764 = vmax.f32 %v656, 0.0
    %v765 = vmax.f32 %v659, 0.0
    %v766 = vmax.f32 %v664, 0.0
    %v767 = vmax.f32 %v667, 0.0
    %v768 = vmax.f32 %v672, 0.0
    %v769 = vmax.f32 %v675, 0.0
    %v770 = vmax.f32 %v680, 0.0
    %v771 = vmax.f32 %v683, 0.0
    %v772 = vmax.f32 %v688, 0.0
    %v773 = vmax.f32 %v691, 0.0
    %v774 = vmax.f32 %v696, 0.0
    %v775 = vmax.f32 %v699, 0.0
    %v776 = vmax.f32 %v704, 0.0
    %v777 = vmax.f32 %v707, 0.0
    %v778 = vmax.f32 %v712, 0.0
    %v779 = vmax.f32 %v715, 0.0
    %v780 = vmax.f32 %v720, 0.0
    %v781 = vmax.f32 %v723, 0.0
    %v782 = vmax.f32 %v728, 0.0
    %v783 = vmax.f32 %v731, 0.0
    %v784 = vmax.f32 %v736, 0.0
    %v785 = vmax.f32 %v739, 0.0
    %v786 = vmax.f32 %v744, 0.0
    %v787 = vmax.f32 %v747, 0.0
    %v788 = vmax.f32 %v752, 0.0
    %v789 = vmax.f32 %v755, 0.0
    %v790 = vpack.c.bf16 %v759, %v758
    %v791 = vpack.c.bf16 %v761, %v760
    %v792 = vpack.c.bf16 %v763, %v762
    %v793 = vpack.c.bf16 %v765, %v764
    %v794 = vpack.c.bf16 %v767, %v766
    %v795 = vpack.c.bf16 %v769, %v768
    %v796 = vpack.c.bf16 %v771, %v770
    %v797 = vpack.c.bf16 %v773, %v772
    %v798 = vpack.c.bf16 %v775, %v774
    %v799 = vpack.c.bf16 %v777, %v776
    %v800 = vpack.c.bf16 %v779, %v778
    %v801 = vpack.c.bf16 %v781, %v780
    %v802 = vpack.c.bf16 %v783, %v782
    %v803 = vpack.c.bf16 %v785, %v784
    %v804 = vpack.c.bf16 %v787, %v786
    %v805 = vpack.c.bf16 %v789, %v788
    %v806 = vld [vmem:[%s5] sm:$0xf]
    %v807 = vld [vmem:[%s5 + $0x4] sm:$0xf]
    %v808 = vld [vmem:[%s5 + $0x8] sm:$0xf]
    %v809 = vld [vmem:[%s5 + $0xc] sm:$0xf]
    %v810 = vld [vmem:[%s5 + $0x10] sm:$0xf]
    %v811 = vld [vmem:[%s5 + $0x14] sm:$0xf]
    %v812 = vld [vmem:[%s5 + $0x18] sm:$0xf]
    %v813 = vld [vmem:[%s5 + $0x1c] sm:$0xf]
    %v814 = vld [vmem:[%s5 + $0x20] sm:$0xf]
    %v815 = vld [vmem:[%s5 + $0x24] sm:$0xf]
    %v816 = vld [vmem:[%s5 + $0x28] sm:$0xf]
    %v817 = vld [vmem:[%s5 + $0x2c] sm:$0xf]
    %v818 = vld [vmem:[%s5 + $0x30] sm:$0xf]
    %v819 = vld [vmem:[%s5 + $0x34] sm:$0xf]
    %v820 = vld [vmem:[%s5 + $0x38] sm:$0xf]
    %v821 = vld [vmem:[%s5 + $0x3c] sm:$0xf]
    %v822 = vld [vmem:[%s6] sm:$0x1]
    %v824 = vlaneseq
    %v825 = vshrl.u32 %v824, 7
    %v826 = vsub.s32 0, %v825
    %v827 = vrot.slane %v822, %v826
    %v845 = vunpack.c.l.b16 %v806
    %v846 = vunpack.c.l.b16 %v807
    %v847 = vunpack.c.l.b16 %v808
    %v848 = vunpack.c.l.b16 %v809
    %v849 = vunpack.c.l.b16 %v810
    %v850 = vunpack.c.l.b16 %v811
    %v851 = vunpack.c.l.b16 %v812
    %v852 = vunpack.c.l.b16 %v813
    %v853 = vunpack.c.l.b16 %v814
    %v854 = vunpack.c.l.b16 %v815
    %v855 = vunpack.c.l.b16 %v816
    %v856 = vunpack.c.l.b16 %v817
    %v857 = vunpack.c.l.b16 %v818
    %v858 = vunpack.c.l.b16 %v819
    %v859 = vunpack.c.l.b16 %v820
    %v860 = vunpack.c.l.b16 %v821
    %v861 = vpack.c.b16 %v846, %v845
    %v862 = vpack.c.b16 %v848, %v847
    %v863 = vpack.c.b16 %v850, %v849
    %v864 = vpack.c.b16 %v852, %v851
    %v865 = vpack.c.b16 %v854, %v853
    %v866 = vpack.c.b16 %v856, %v855
    %v867 = vpack.c.b16 %v858, %v857
    %v868 = vpack.c.b16 %v860, %v859
    %877 = vmatprep.subr.bf16.mxu0 0
    %878 = vmatpush1.bf16.msra.mxu0 %v868
    %879 = vmatprep.subr.bf16.mxu0 0
    %880 = vmatpush1.bf16.msra.mxu0 %v867
    %881 = vmatprep.subr.bf16.mxu0 0
    %882 = vmatpush1.bf16.msra.mxu0 %v866
    %883 = vmatprep.subr.bf16.mxu0 0
    %884 = vmatpush1.bf16.msra.mxu0 %v865
    %885 = vmatprep.subr.bf16.mxu0 0
    %886 = vmatpush1.bf16.msra.mxu0 %v864
    %887 = vmatprep.subr.bf16.mxu0 0
    %888 = vmatpush1.bf16.msra.mxu0 %v863
    %889 = vmatprep.subr.bf16.mxu0 0
    %890 = vmatpush1.bf16.msra.mxu0 %v862
    %891 = vmatprep.subr.bf16.mxu0 0
    %892 = vmatpush1.bf16.msra.mxu0 %v861
    %893 = vmatprep.subr.bf16.mxu0 0
    %894 = vmatpush2.bf16.msra.mxu0 0
    %895 = vmatprep.subr.bf16.mxu0 0
    %896 = vmatpush2.bf16.msra.mxu0 0
    %897 = vmatprep.subr.bf16.mxu0 0
    %898 = vmatpush2.bf16.msra.mxu0 0
    %899 = vmatprep.subr.bf16.mxu0 0
    %900 = vmatpush2.bf16.msra.mxu0 0
    %901 = vmatprep.subr.bf16.mxu0 0
    %902 = vmatpush2.bf16.msra.mxu0 0
    %903 = vmatprep.subr.bf16.mxu0 0
    %904 = vmatpush2.bf16.msra.mxu0 0
    %905 = vmatprep.subr.bf16.mxu0 0
    %906 = vmatpush2.bf16.msra.mxu0 0
    %907 = vmatprep.subr.bf16.mxu0 0
    %908 = vmatpush2.bf16.msra.mxu0 0
    %909 = vmatprep.mubr.bf16.mxu0 0
    %910 = vmatmul.mubr.bf16.gmra.mxu0 %v790
    %v911 = vpop.f32.mrf.mxu0
    %v912 = vadd.f32 %v827, %v911
    %v913 = vpop.f32.mrf.mxu0
    %v914 = vpop.f32.mrf.mxu0
    %v915 = vadd.f32 %v827, %v914
    %v916 = vpop.f32.mrf.mxu0
    %917 = vmatprep.mubr.bf16.mxu0 0
    %918 = vmatmul.mubr.bf16.gmra.mxu0 %v791
    %v919 = vpop.f32.mrf.mxu0
    %v920 = vadd.f32 %v827, %v919
    %v921 = vpop.f32.mrf.mxu0
    %v922 = vpop.f32.mrf.mxu0
    %v923 = vadd.f32 %v827, %v922
    %v924 = vpop.f32.mrf.mxu0
    %925 = vmatprep.mubr.bf16.mxu0 0
    %926 = vmatmul.mubr.bf16.gmra.mxu0 %v792
    %v927 = vpop.f32.mrf.mxu0
    %v928 = vadd.f32 %v827, %v927
    %v929 = vpop.f32.mrf.mxu0
    %v930 = vpop.f32.mrf.mxu0
    %v931 = vadd.f32 %v827, %v930
    %v932 = vpop.f32.mrf.mxu0
    %933 = vmatprep.mubr.bf16.mxu0 0
    %934 = vmatmul.mubr.bf16.gmra.mxu0 %v793
    %v935 = vpop.f32.mrf.mxu0
    %v936 = vadd.f32 %v827, %v935
    %v937 = vpop.f32.mrf.mxu0
    %v938 = vpop.f32.mrf.mxu0
    %v939 = vadd.f32 %v827, %v938
    %v940 = vpop.f32.mrf.mxu0
    %941 = vmatprep.mubr.bf16.mxu0 0
    %942 = vmatmul.mubr.bf16.gmra.mxu0 %v794
    %v943 = vpop.f32.mrf.mxu0
    %v944 = vadd.f32 %v827, %v943
    %v945 = vpop.f32.mrf.mxu0
    %v946 = vpop.f32.mrf.mxu0
    %v947 = vadd.f32 %v827, %v946
    %v948 = vpop.f32.mrf.mxu0
    %949 = vmatprep.mubr.bf16.mxu0 0
    %950 = vmatmul.mubr.bf16.gmra.mxu0 %v795
    %v951 = vpop.f32.mrf.mxu0
    %v952 = vadd.f32 %v827, %v951
    %v953 = vpop.f32.mrf.mxu0
    %v954 = vpop.f32.mrf.mxu0
    %v955 = vadd.f32 %v827, %v954
    %v956 = vpop.f32.mrf.mxu0
    %957 = vmatprep.mubr.bf16.mxu0 0
    %958 = vmatmul.mubr.bf16.gmra.mxu0 %v796
    %v959 = vpop.f32.mrf.mxu0
    %v960 = vadd.f32 %v827, %v959
    %v961 = vpop.f32.mrf.mxu0
    %v962 = vpop.f32.mrf.mxu0
    %v963 = vadd.f32 %v827, %v962
    %v964 = vpop.f32.mrf.mxu0
    %965 = vmatprep.mubr.bf16.mxu0 0
    %966 = vmatmul.mubr.bf16.gmra.mxu0 %v797
    %v967 = vpop.f32.mrf.mxu0
    %v968 = vadd.f32 %v827, %v967
    %v969 = vpop.f32.mrf.mxu0
    %v970 = vpop.f32.mrf.mxu0
    %v971 = vadd.f32 %v827, %v970
    %v972 = vpop.f32.mrf.mxu0
    %973 = vmatprep.mubr.bf16.mxu0 0
    %974 = vmatmul.mubr.bf16.gmra.mxu0 %v798
    %v975 = vpop.f32.mrf.mxu0
    %v976 = vadd.f32 %v827, %v975
    %v977 = vpop.f32.mrf.mxu0
    %v978 = vpop.f32.mrf.mxu0
    %v979 = vadd.f32 %v827, %v978
    %v980 = vpop.f32.mrf.mxu0
    %981 = vmatprep.mubr.bf16.mxu0 0
    %982 = vmatmul.mubr.bf16.gmra.mxu0 %v799
    %v983 = vpop.f32.mrf.mxu0
    %v984 = vadd.f32 %v827, %v983
    %v985 = vpop.f32.mrf.mxu0
    %v986 = vpop.f32.mrf.mxu0
    %v987 = vadd.f32 %v827, %v986
    %v988 = vpop.f32.mrf.mxu0
    %989 = vmatprep.mubr.bf16.mxu0 0
    %990 = vmatmul.mubr.bf16.gmra.mxu0 %v800
    %v991 = vpop.f32.mrf.mxu0
    %v992 = vadd.f32 %v827, %v991
    %v993 = vpop.f32.mrf.mxu0
    %v994 = vpop.f32.mrf.mxu0
    %v995 = vadd.f32 %v827, %v994
    %v996 = vpop.f32.mrf.mxu0
    %997 = vmatprep.mubr.bf16.mxu0 0
    %998 = vmatmul.mubr.bf16.gmra.mxu0 %v801
    %v999 = vpop.f32.mrf.mxu0
    %v1000 = vadd.f32 %v827, %v999
    %v1001 = vpop.f32.mrf.mxu0
    %v1002 = vpop.f32.mrf.mxu0
    %v1003 = vadd.f32 %v827, %v1002
    %v1004 = vpop.f32.mrf.mxu0
    %1005 = vmatprep.mubr.bf16.mxu0 0
    %1006 = vmatmul.mubr.bf16.gmra.mxu0 %v802
    %v1007 = vpop.f32.mrf.mxu0
    %v1008 = vadd.f32 %v827, %v1007
    %v1009 = vpop.f32.mrf.mxu0
    %v1010 = vpop.f32.mrf.mxu0
    %v1011 = vadd.f32 %v827, %v1010
    %v1012 = vpop.f32.mrf.mxu0
    %1013 = vmatprep.mubr.bf16.mxu0 0
    %1014 = vmatmul.mubr.bf16.gmra.mxu0 %v803
    %v1015 = vpop.f32.mrf.mxu0
    %v1016 = vadd.f32 %v827, %v1015
    %v1017 = vpop.f32.mrf.mxu0
    %v1018 = vpop.f32.mrf.mxu0
    %v1019 = vadd.f32 %v827, %v1018
    %v1020 = vpop.f32.mrf.mxu0
    %1021 = vmatprep.mubr.bf16.mxu0 0
    %1022 = vmatmul.mubr.bf16.gmra.mxu0 %v804
    %v1023 = vpop.f32.mrf.mxu0
    %v1024 = vadd.f32 %v827, %v1023
    %v1025 = vpop.f32.mrf.mxu0
    %v1026 = vpop.f32.mrf.mxu0
    %v1027 = vadd.f32 %v827, %v1026
    %v1028 = vpop.f32.mrf.mxu0
    %1029 = vmatprep.mubr.bf16.mxu0 0
    %1030 = vmatmul.mubr.bf16.gmra.mxu0 %v805
    %v1031 = vpop.f32.mrf.mxu0
    %v1032 = vadd.f32 %v827, %v1031
    %v1033 = vpop.f32.mrf.mxu0
    %v1034 = vpop.f32.mrf.mxu0
    %v1035 = vadd.f32 %v827, %v1034
    %v1036 = vpop.f32.mrf.mxu0
    %1037 = vdwg.mxu0
    %v1038 = vmax.f32 %v912, 0.0
    %v1039 = vmax.f32 %v915, 0.0
    %v1040 = vmax.f32 %v920, 0.0
    %v1041 = vmax.f32 %v923, 0.0
    %v1042 = vmax.f32 %v928, 0.0
    %v1043 = vmax.f32 %v931, 0.0
    %v1044 = vmax.f32 %v936, 0.0
    %v1045 = vmax.f32 %v939, 0.0
    %v1046 = vmax.f32 %v944, 0.0
    %v1047 = vmax.f32 %v947, 0.0
    %v1048 = vmax.f32 %v952, 0.0
    %v1049 = vmax.f32 %v955, 0.0
    %v1050 = vmax.f32 %v960, 0.0
    %v1051 = vmax.f32 %v963, 0.0
    %v1052 = vmax.f32 %v968, 0.0
    %v1053 = vmax.f32 %v971, 0.0
    %v1054 = vmax.f32 %v976, 0.0
    %v1055 = vmax.f32 %v979, 0.0
    %v1056 = vmax.f32 %v984, 0.0
    %v1057 = vmax.f32 %v987, 0.0
    %v1058 = vmax.f32 %v992, 0.0
    %v1059 = vmax.f32 %v995, 0.0
    %v1060 = vmax.f32 %v1000, 0.0
    %v1061 = vmax.f32 %v1003, 0.0
    %v1062 = vmax.f32 %v1008, 0.0
    %v1063 = vmax.f32 %v1011, 0.0
    %v1064 = vmax.f32 %v1016, 0.0
    %v1065 = vmax.f32 %v1019, 0.0
    %v1066 = vmax.f32 %v1024, 0.0
    %v1067 = vmax.f32 %v1027, 0.0
    %v1068 = vmax.f32 %v1032, 0.0
    %v1069 = vmax.f32 %v1035, 0.0
    %v1070 = vpack.c.bf16 %v1039, %v1038
    %v1071 = vpack.c.bf16 %v1041, %v1040
    %v1072 = vpack.c.bf16 %v1043, %v1042
    %v1073 = vpack.c.bf16 %v1045, %v1044
    %v1074 = vpack.c.bf16 %v1047, %v1046
    %v1075 = vpack.c.bf16 %v1049, %v1048
    %v1076 = vpack.c.bf16 %v1051, %v1050
    %v1077 = vpack.c.bf16 %v1053, %v1052
    %v1078 = vpack.c.bf16 %v1055, %v1054
    %v1079 = vpack.c.bf16 %v1057, %v1056
    %v1080 = vpack.c.bf16 %v1059, %v1058
    %v1081 = vpack.c.bf16 %v1061, %v1060
    %v1082 = vpack.c.bf16 %v1063, %v1062
    %v1083 = vpack.c.bf16 %v1065, %v1064
    %v1084 = vpack.c.bf16 %v1067, %v1066
    %v1085 = vpack.c.bf16 %v1069, %v1068
    %v1086 = vld [vmem:[%s7] sm:$0xf]
    %v1087 = vld [vmem:[%s7 + $0x4] sm:$0xf]
    %v1088 = vld [vmem:[%s7 + $0x8] sm:$0xf]
    %v1089 = vld [vmem:[%s7 + $0xc] sm:$0xf]
    %v1090 = vld [vmem:[%s7 + $0x10] sm:$0xf]
    %v1091 = vld [vmem:[%s7 + $0x14] sm:$0xf]
    %v1092 = vld [vmem:[%s7 + $0x18] sm:$0xf]
    %v1093 = vld [vmem:[%s7 + $0x1c] sm:$0xf]
    %v1094 = vld [vmem:[%s7 + $0x20] sm:$0xf]
    %v1095 = vld [vmem:[%s7 + $0x24] sm:$0xf]
    %v1096 = vld [vmem:[%s7 + $0x28] sm:$0xf]
    %v1097 = vld [vmem:[%s7 + $0x2c] sm:$0xf]
    %v1098 = vld [vmem:[%s7 + $0x30] sm:$0xf]
    %v1099 = vld [vmem:[%s7 + $0x34] sm:$0xf]
    %v1100 = vld [vmem:[%s7 + $0x38] sm:$0xf]
    %v1101 = vld [vmem:[%s7 + $0x3c] sm:$0xf]
    %v1102 = vld [vmem:[%s8] sm:$0x1]
    %v1104 = vlaneseq
    %v1105 = vshrl.u32 %v1104, 7
    %v1106 = vsub.s32 0, %v1105
    %v1107 = vrot.slane %v1102, %v1106
    %v1125 = vunpack.c.l.b16 %v1086
    %v1126 = vunpack.c.l.b16 %v1087
    %v1127 = vunpack.c.l.b16 %v1088
    %v1128 = vunpack.c.l.b16 %v1089
    %v1129 = vunpack.c.l.b16 %v1090
    %v1130 = vunpack.c.l.b16 %v1091
    %v1131 = vunpack.c.l.b16 %v1092
    %v1132 = vunpack.c.l.b16 %v1093
    %v1133 = vunpack.c.l.b16 %v1094
    %v1134 = vunpack.c.l.b16 %v1095
    %v1135 = vunpack.c.l.b16 %v1096
    %v1136 = vunpack.c.l.b16 %v1097
    %v1137 = vunpack.c.l.b16 %v1098
    %v1138 = vunpack.c.l.b16 %v1099
    %v1139 = vunpack.c.l.b16 %v1100
    %v1140 = vunpack.c.l.b16 %v1101
    %v1141 = vpack.c.b16 %v1126, %v1125
    %v1142 = vpack.c.b16 %v1128, %v1127
    %v1143 = vpack.c.b16 %v1130, %v1129
    %v1144 = vpack.c.b16 %v1132, %v1131
    %v1145 = vpack.c.b16 %v1134, %v1133
    %v1146 = vpack.c.b16 %v1136, %v1135
    %v1147 = vpack.c.b16 %v1138, %v1137
    %v1148 = vpack.c.b16 %v1140, %v1139
    %1157 = vmatprep.subr.bf16.mxu0 0
    %1158 = vmatpush1.bf16.msra.mxu0 %v1148
    %1159 = vmatprep.subr.bf16.mxu0 0
    %1160 = vmatpush1.bf16.msra.mxu0 %v1147
    %1161 = vmatprep.subr.bf16.mxu0 0
    %1162 = vmatpush1.bf16.msra.mxu0 %v1146
    %1163 = vmatprep.subr.bf16.mxu0 0
    %1164 = vmatpush1.bf16.msra.mxu0 %v1145
    %1165 = vmatprep.subr.bf16.mxu0 0
    %1166 = vmatpush1.bf16.msra.mxu0 %v1144
    %1167 = vmatprep.subr.bf16.mxu0 0
    %1168 = vmatpush1.bf16.msra.mxu0 %v1143
    %1169 = vmatprep.subr.bf16.mxu0 0
    %1170 = vmatpush1.bf16.msra.mxu0 %v1142
    %1171 = vmatprep.subr.bf16.mxu0 0
    %1172 = vmatpush1.bf16.msra.mxu0 %v1141
    %1173 = vmatprep.subr.bf16.mxu0 0
    %1174 = vmatpush2.bf16.msra.mxu0 0
    %1175 = vmatprep.subr.bf16.mxu0 0
    %1176 = vmatpush2.bf16.msra.mxu0 0
    %1177 = vmatprep.subr.bf16.mxu0 0
    %1178 = vmatpush2.bf16.msra.mxu0 0
    %1179 = vmatprep.subr.bf16.mxu0 0
    %1180 = vmatpush2.bf16.msra.mxu0 0
    %1181 = vmatprep.subr.bf16.mxu0 0
    %1182 = vmatpush2.bf16.msra.mxu0 0
    %1183 = vmatprep.subr.bf16.mxu0 0
    %1184 = vmatpush2.bf16.msra.mxu0 0
    %1185 = vmatprep.subr.bf16.mxu0 0
    %1186 = vmatpush2.bf16.msra.mxu0 0
    %1187 = vmatprep.subr.bf16.mxu0 0
    %1188 = vmatpush2.bf16.msra.mxu0 0
    %1189 = vmatprep.mubr.bf16.mxu0 0
    %1190 = vmatmul.mubr.bf16.gmra.mxu0 %v1070
    %v1191 = vpop.f32.mrf.mxu0
    %v1192 = vadd.f32 %v1107, %v1191
    %v1193 = vpop.f32.mrf.mxu0
    %v1194 = vpop.f32.mrf.mxu0
    %v1195 = vadd.f32 %v1107, %v1194
    %v1196 = vpop.f32.mrf.mxu0
    %1197 = vmatprep.mubr.bf16.mxu0 0
    %1198 = vmatmul.mubr.bf16.gmra.mxu0 %v1071
    %v1199 = vpop.f32.mrf.mxu0
    %v1200 = vadd.f32 %v1107, %v1199
    %v1201 = vpop.f32.mrf.mxu0
    %v1202 = vpop.f32.mrf.mxu0
    %v1203 = vadd.f32 %v1107, %v1202
    %v1204 = vpop.f32.mrf.mxu0
    %1205 = vmatprep.mubr.bf16.mxu0 0
    %1206 = vmatmul.mubr.bf16.gmra.mxu0 %v1072
    %v1207 = vpop.f32.mrf.mxu0
    %v1208 = vadd.f32 %v1107, %v1207
    %v1209 = vpop.f32.mrf.mxu0
    %v1210 = vpop.f32.mrf.mxu0
    %v1211 = vadd.f32 %v1107, %v1210
    %v1212 = vpop.f32.mrf.mxu0
    %1213 = vmatprep.mubr.bf16.mxu0 0
    %1214 = vmatmul.mubr.bf16.gmra.mxu0 %v1073
    %v1215 = vpop.f32.mrf.mxu0
    %v1216 = vadd.f32 %v1107, %v1215
    %v1217 = vpop.f32.mrf.mxu0
    %v1218 = vpop.f32.mrf.mxu0
    %v1219 = vadd.f32 %v1107, %v1218
    %v1220 = vpop.f32.mrf.mxu0
    %1221 = vmatprep.mubr.bf16.mxu0 0
    %1222 = vmatmul.mubr.bf16.gmra.mxu0 %v1074
    %v1223 = vpop.f32.mrf.mxu0
    %v1224 = vadd.f32 %v1107, %v1223
    %v1225 = vpop.f32.mrf.mxu0
    %v1226 = vpop.f32.mrf.mxu0
    %v1227 = vadd.f32 %v1107, %v1226
    %v1228 = vpop.f32.mrf.mxu0
    %1229 = vmatprep.mubr.bf16.mxu0 0
    %1230 = vmatmul.mubr.bf16.gmra.mxu0 %v1075
    %v1231 = vpop.f32.mrf.mxu0
    %v1232 = vadd.f32 %v1107, %v1231
    %v1233 = vpop.f32.mrf.mxu0
    %v1234 = vpop.f32.mrf.mxu0
    %v1235 = vadd.f32 %v1107, %v1234
    %v1236 = vpop.f32.mrf.mxu0
    %1237 = vmatprep.mubr.bf16.mxu0 0
    %1238 = vmatmul.mubr.bf16.gmra.mxu0 %v1076
    %v1239 = vpop.f32.mrf.mxu0
    %v1240 = vadd.f32 %v1107, %v1239
    %v1241 = vpop.f32.mrf.mxu0
    %v1242 = vpop.f32.mrf.mxu0
    %v1243 = vadd.f32 %v1107, %v1242
    %v1244 = vpop.f32.mrf.mxu0
    %1245 = vmatprep.mubr.bf16.mxu0 0
    %1246 = vmatmul.mubr.bf16.gmra.mxu0 %v1077
    %v1247 = vpop.f32.mrf.mxu0
    %v1248 = vadd.f32 %v1107, %v1247
    %v1249 = vpop.f32.mrf.mxu0
    %v1250 = vpop.f32.mrf.mxu0
    %v1251 = vadd.f32 %v1107, %v1250
    %v1252 = vpop.f32.mrf.mxu0
    %1253 = vmatprep.mubr.bf16.mxu0 0
    %1254 = vmatmul.mubr.bf16.gmra.mxu0 %v1078
    %v1255 = vpop.f32.mrf.mxu0
    %v1256 = vadd.f32 %v1107, %v1255
    %v1257 = vpop.f32.mrf.mxu0
    %v1258 = vpop.f32.mrf.mxu0
    %v1259 = vadd.f32 %v1107, %v1258
    %v1260 = vpop.f32.mrf.mxu0
    %1261 = vmatprep.mubr.bf16.mxu0 0
    %1262 = vmatmul.mubr.bf16.gmra.mxu0 %v1079
    %v1263 = vpop.f32.mrf.mxu0
    %v1264 = vadd.f32 %v1107, %v1263
    %v1265 = vpop.f32.mrf.mxu0
    %v1266 = vpop.f32.mrf.mxu0
    %v1267 = vadd.f32 %v1107, %v1266
    %v1268 = vpop.f32.mrf.mxu0
    %1269 = vmatprep.mubr.bf16.mxu0 0
    %1270 = vmatmul.mubr.bf16.gmra.mxu0 %v1080
    %v1271 = vpop.f32.mrf.mxu0
    %v1272 = vadd.f32 %v1107, %v1271
    %v1273 = vpop.f32.mrf.mxu0
    %v1274 = vpop.f32.mrf.mxu0
    %v1275 = vadd.f32 %v1107, %v1274
    %v1276 = vpop.f32.mrf.mxu0
    %1277 = vmatprep.mubr.bf16.mxu0 0
    %1278 = vmatmul.mubr.bf16.gmra.mxu0 %v1081
    %v1279 = vpop.f32.mrf.mxu0
    %v1280 = vadd.f32 %v1107, %v1279
    %v1281 = vpop.f32.mrf.mxu0
    %v1282 = vpop.f32.mrf.mxu0
    %v1283 = vadd.f32 %v1107, %v1282
    %v1284 = vpop.f32.mrf.mxu0
    %1285 = vmatprep.mubr.bf16.mxu0 0
    %1286 = vmatmul.mubr.bf16.gmra.mxu0 %v1082
    %v1287 = vpop.f32.mrf.mxu0
    %v1288 = vadd.f32 %v1107, %v1287
    %v1289 = vpop.f32.mrf.mxu0
    %v1290 = vpop.f32.mrf.mxu0
    %v1291 = vadd.f32 %v1107, %v1290
    %v1292 = vpop.f32.mrf.mxu0
    %1293 = vmatprep.mubr.bf16.mxu0 0
    %1294 = vmatmul.mubr.bf16.gmra.mxu0 %v1083
    %v1295 = vpop.f32.mrf.mxu0
    %v1296 = vadd.f32 %v1107, %v1295
    %v1297 = vpop.f32.mrf.mxu0
    %v1298 = vpop.f32.mrf.mxu0
    %v1299 = vadd.f32 %v1107, %v1298
    %v1300 = vpop.f32.mrf.mxu0
    %1301 = vmatprep.mubr.bf16.mxu0 0
    %1302 = vmatmul.mubr.bf16.gmra.mxu0 %v1084
    %v1303 = vpop.f32.mrf.mxu0
    %v1304 = vadd.f32 %v1107, %v1303
    %v1305 = vpop.f32.mrf.mxu0
    %v1306 = vpop.f32.mrf.mxu0
    %v1307 = vadd.f32 %v1107, %v1306
    %v1308 = vpop.f32.mrf.mxu0
    %1309 = vmatprep.mubr.bf16.mxu0 0
    %1310 = vmatmul.mubr.bf16.gmra.mxu0 %v1085
    %v1311 = vpop.f32.mrf.mxu0
    %v1312 = vadd.f32 %v1107, %v1311
    %v1313 = vpop.f32.mrf.mxu0
    %v1314 = vpop.f32.mrf.mxu0
    %v1315 = vadd.f32 %v1107, %v1314
    %v1316 = vpop.f32.mrf.mxu0
    %1317 = vdwg.mxu0
    %v1318 = vmax.f32 %v1192, 0.0
    %v1319 = vmax.f32 %v1195, 0.0
    %v1320 = vmax.f32 %v1200, 0.0
    %v1321 = vmax.f32 %v1203, 0.0
    %v1322 = vmax.f32 %v1208, 0.0
    %v1323 = vmax.f32 %v1211, 0.0
    %v1324 = vmax.f32 %v1216, 0.0
    %v1325 = vmax.f32 %v1219, 0.0
    %v1326 = vmax.f32 %v1224, 0.0
    %v1327 = vmax.f32 %v1227, 0.0
    %v1328 = vmax.f32 %v1232, 0.0
    %v1329 = vmax.f32 %v1235, 0.0
    %v1330 = vmax.f32 %v1240, 0.0
    %v1331 = vmax.f32 %v1243, 0.0
    %v1332 = vmax.f32 %v1248, 0.0
    %v1333 = vmax.f32 %v1251, 0.0
    %v1334 = vmax.f32 %v1256, 0.0
    %v1335 = vmax.f32 %v1259, 0.0
    %v1336 = vmax.f32 %v1264, 0.0
    %v1337 = vmax.f32 %v1267, 0.0
    %v1338 = vmax.f32 %v1272, 0.0
    %v1339 = vmax.f32 %v1275, 0.0
    %v1340 = vmax.f32 %v1280, 0.0
    %v1341 = vmax.f32 %v1283, 0.0
    %v1342 = vmax.f32 %v1288, 0.0
    %v1343 = vmax.f32 %v1291, 0.0
    %v1344 = vmax.f32 %v1296, 0.0
    %v1345 = vmax.f32 %v1299, 0.0
    %v1346 = vmax.f32 %v1304, 0.0
    %v1347 = vmax.f32 %v1307, 0.0
    %v1348 = vmax.f32 %v1312, 0.0
    %v1349 = vmax.f32 %v1315, 0.0
    %v1350 = vpack.c.bf16 %v1319, %v1318
    %v1351 = vpack.c.bf16 %v1321, %v1320
    %v1352 = vpack.c.bf16 %v1323, %v1322
    %v1353 = vpack.c.bf16 %v1325, %v1324
    %v1354 = vpack.c.bf16 %v1327, %v1326
    %v1355 = vpack.c.bf16 %v1329, %v1328
    %v1356 = vpack.c.bf16 %v1331, %v1330
    %v1357 = vpack.c.bf16 %v1333, %v1332
    %v1358 = vpack.c.bf16 %v1335, %v1334
    %v1359 = vpack.c.bf16 %v1337, %v1336
    %v1360 = vpack.c.bf16 %v1339, %v1338
    %v1361 = vpack.c.bf16 %v1341, %v1340
    %v1362 = vpack.c.bf16 %v1343, %v1342
    %v1363 = vpack.c.bf16 %v1345, %v1344
    %v1364 = vpack.c.bf16 %v1347, %v1346
    %v1365 = vpack.c.bf16 %v1349, %v1348
    %v1366 = vld [vmem:[%s9] sm:$0xf]
    %v1367 = vld [vmem:[%s10] sm:$0xff]
    %1369 = vset.pattern.permute.xlu0 0
    %1370 = vperm.xlu0 %1369, %v1367
    %v1371 = vpop.permute.xlu0 %1370
    %1373 = vmatprep.subr.bf16.mxu0 0
    %1374 = vmatpush1.bf16.xpose.msra.mxu0 %v1357
    %1375 = vmatprep.subr.bf16.mxu0 0
    %1376 = vmatpush1.bf16.xpose.msra.mxu0 %v1356
    %1377 = vmatprep.subr.bf16.mxu0 0
    %1378 = vmatpush1.bf16.xpose.msra.mxu0 %v1355
    %1379 = vmatprep.subr.bf16.mxu0 0
    %1380 = vmatpush1.bf16.xpose.msra.mxu0 %v1354
    %1381 = vmatprep.subr.bf16.mxu0 0
    %1382 = vmatpush1.bf16.xpose.msra.mxu0 %v1353
    %1383 = vmatprep.subr.bf16.mxu0 0
    %1384 = vmatpush1.bf16.xpose.msra.mxu0 %v1352
    %1385 = vmatprep.subr.bf16.mxu0 0
    %1386 = vmatpush1.bf16.xpose.msra.mxu0 %v1351
    %1387 = vmatprep.subr.bf16.mxu0 0
    %1388 = vmatpush1.bf16.xpose.msra.mxu0 %v1350
    %1389 = vmatprep.subr.bf16.mxu0 0
    %1390 = vmatpush2.bf16.xpose.msra.mxu0 %v1365
    %1391 = vmatprep.subr.bf16.mxu0 0
    %1392 = vmatpush2.bf16.xpose.msra.mxu0 %v1364
    %1393 = vmatprep.subr.bf16.mxu0 0
    %1394 = vmatpush2.bf16.xpose.msra.mxu0 %v1363
    %1395 = vmatprep.subr.bf16.mxu0 0
    %1396 = vmatpush2.bf16.xpose.msra.mxu0 %v1362
    %1397 = vmatprep.subr.bf16.mxu0 0
    %1398 = vmatpush2.bf16.xpose.msra.mxu0 %v1361
    %1399 = vmatprep.subr.bf16.mxu0 0
    %1400 = vmatpush2.bf16.xpose.msra.mxu0 %v1360
    %1401 = vmatprep.subr.bf16.mxu0 0
    %1402 = vmatpush2.bf16.xpose.msra.mxu0 %v1359
    %1403 = vmatprep.subr.bf16.mxu0 0
    %1404 = vmatpush2.bf16.xpose.msra.mxu0 %v1358
    %1405 = vmatprep.mubr.bf16.mxu0 0
    %1406 = vmatmul.mubr.bf16.gmra.mxu0 %v1366
    %v1407 = vpop.f32.mrf.mxu0
    %v1408 = vadd.f32 %v1371, %v1407
    %v1409 = vpop.f32.mrf.mxu0
    %v1410 = vadd.f32 %v1371, %v1409
    %v1411 = vpop.f32.mrf.mxu0
    %v1412 = vpop.f32.mrf.mxu0
    %1413 = vdwg.mxu0
    %1414 = vst [vmem:[#allocation2] sm:$0xff] %v1408
    %1415 = vst [vmem:[#allocation2 + $0x8] sm:$0xff] %v1410
    // Predicated region
    $region46: #{tpu_custom_call.1} parent=1 // pred_check
      _
    $region47: #{tpu_custom_call.1} parent=1 // pred_check_branch
      %1417 = sbr.rel (0) target = $region49
    $region48: #{tpu_custom_call.1} parent=1 // pred_region
      %s1419 = ssub.s32 256, 256
      %1420 = vsyncadd [#allocation3], %s1419
      %s1422 = sshll.u32 [#allocation2], 4
      %s1423 = int_to_ptr.vmem [resolvable:$true] %s1422
      %1425 = dma.vmem_to_hbm [thread:$0]  %s1423, 256, %s11, [#allocation3]
    $region49: #{tpu_custom_call.1} parent=1 // pred_fallthru
      _
    // Predicated region
    $region50: #{tpu_custom_call.1} parent=1 // pred_check
      _
    $region51: #{tpu_custom_call.1} parent=1 // pred_check_branch
      %1427 = sbr.rel (0) target = $region53
    $region52: #{tpu_custom_call.1} parent=1 // pred_region
      %1428 = dma.done [#allocation3], 256
    $region53: #{tpu_custom_call.1} parent=1 // pred_fallthru
      _
    %1429 = vsyncpa [#allocation3], 1

// kernel: tpu_custom_call.1
$region0: #{tpu_custom_call.1}
  #allocation0 [shape = 'u32[]', space=smem, size = 0x4, offset = 0x4, fixed_abs, tag = 'smem constant byte address 0x4 - core index']
  #allocation1 [shape = 'u32[144,128]{1,0:T(1,128)}', space=vmem, size = 0x12000, scoped, tag = 'internal scratch']
  %s0 = inlined_call_operand.vmem [shape: f32[256,32], index: 0, kind: input, shape index: {}]
  %s1 = inlined_call_operand.vmem [shape: bf16[32,256], index: 1, kind: input, shape index: {}]
  %s2 = inlined_call_operand.vmem [shape: f32[1,256], index: 2, kind: input, shape index: {}]
  %s3 = inlined_call_operand.vmem [shape: bf16[256,128], index: 3, kind: input, shape index: {}]
  %s4 = inlined_call_operand.vmem [shape: f32[1,128], index: 4, kind: input, shape index: {}]
  %s5 = inlined_call_operand.vmem [shape: bf16[128,128], index: 5, kind: input, shape index: {}]
  %s6 = inlined_call_operand.vmem [shape: f32[1,128], index: 6, kind: input, shape index: {}]
  %s7 = inlined_call_operand.vmem [shape: bf16[128,128], index: 7, kind: input, shape index: {}]
  %s8 = inlined_call_operand.vmem [shape: f32[1,128], index: 8, kind: input, shape index: {}]
  %s9 = inlined_call_operand.vmem [shape: bf16[8,128], index: 9, kind: input, shape index: {}]
  %s10 = inlined_call_operand.vmem [shape: f32[8,1], index: 10, kind: input, shape index: {}]
  %s11 = inlined_call_operand.hbm [shape: f32[8,256], index: 11, kind: output, shape index: {}]
  %s12 = sld [smem:[#allocation0]]
  $region54: #{tpu_custom_call.1} parent=0
    _
  %s14 = ssub.s32 1, %s12
  %s15 = scalar_select 0, %s14, %s12
  $region1: #{tpu_custom_call.1} parent=0
    #allocation2 [shape = 'u8[8192]{0}', space=vmem, size = 0x2000, scoped, tag = 'output window, operand 0, single buffered']
    #allocation3 [shape = 's32[1]{0}', space=sflag, size = 0x4, scoped, tag = 'scoped memory for tpu_custom_call.1']
    %16 = vsyncpa [#allocation3], 0
    // Predicated region
    $region2: #{tpu_custom_call.1} parent=1 // pred_check
      _
    $region3: #{tpu_custom_call.1} parent=1 // pred_check_branch
      %18 = sbr.rel (0) target = $region5
    $region4: #{tpu_custom_call.1} parent=1 // pred_region
      _
    $region5: #{tpu_custom_call.1} parent=1 // pred_fallthru
      _
    // Predicated region
    $region6: #{tpu_custom_call.1} parent=1 // pred_check
      _
    $region7: #{tpu_custom_call.1} parent=1 // pred_check_branch
      %20 = sbr.rel (0) target = $region9
    $region8: #{tpu_custom_call.1} parent=1 // pred_region
      _
    $region9: #{tpu_custom_call.1} parent=1 // pred_fallthru
      _
    // Predicated region
    $region10: #{tpu_custom_call.1} parent=1 // pred_check
      _
    $region11: #{tpu_custom_call.1} parent=1 // pred_check_branch
      %22 = sbr.rel (0) target = $region13
    $region12: #{tpu_custom_call.1} parent=1 // pred_region
      _
    $region13: #{tpu_custom_call.1} parent=1 // pred_fallthru
      _
    // Predicated region
    $region14: #{tpu_custom_call.1} parent=1 // pred_check
      _
    $region15: #{tpu_custom_call.1} parent=1 // pred_check_branch
      %24 = sbr.rel (0) target = $region17
    $region16: #{tpu_custom_call.1} parent=1 // pred_region
      _
    $region17: #{tpu_custom_call.1} parent=1 // pred_fallthru
      _
    // Predicated region
    $region18: #{tpu_custom_call.1} parent=1 // pred_check
      _
    $region19: #{tpu_custom_call.1} parent=1 // pred_check_branch
      %26 = sbr.rel (0) target = $region21
    $region20: #{tpu_custom_call.1} parent=1 // pred_region
      _
    $region21: #{tpu_custom_call.1} parent=1 // pred_fallthru
      _
    // Predicated region
    $region22: #{tpu_custom_call.1} parent=1 // pred_check
      _
    $region23: #{tpu_custom_call.1} parent=1 // pred_check_branch
      %28 = sbr.rel (0) target = $region25
    $region24: #{tpu_custom_call.1} parent=1 // pred_region
      _
    $region25: #{tpu_custom_call.1} parent=1 // pred_fallthru
      _
    // Predicated region
    $region26: #{tpu_custom_call.1} parent=1 // pred_check
      _
    $region27: #{tpu_custom_call.1} parent=1 // pred_check_branch
      %30 = sbr.rel (0) target = $region29
    $region28: #{tpu_custom_call.1} parent=1 // pred_region
      _
    $region29: #{tpu_custom_call.1} parent=1 // pred_fallthru
      _
    // Predicated region
    $region30: #{tpu_custom_call.1} parent=1 // pred_check
      _
    $region31: #{tpu_custom_call.1} parent=1 // pred_check_branch
      %32 = sbr.rel (0) target = $region33
    $region32: #{tpu_custom_call.1} parent=1 // pred_region
      _
    $region33: #{tpu_custom_call.1} parent=1 // pred_fallthru
      _
    // Predicated region
    $region34: #{tpu_custom_call.1} parent=1 // pred_check
      _
    $region35: #{tpu_custom_call.1} parent=1 // pred_check_branch
      %34 = sbr.rel (0) target = $region37
    $region36: #{tpu_custom_call.1} parent=1 // pred_region
      _
    $region37: #{tpu_custom_call.1} parent=1 // pred_fallthru
      _
    // Predicated region
    $region38: #{tpu_custom_call.1} parent=1 // pred_check
      _
    $region39: #{tpu_custom_call.1} parent=1 // pred_check_branch
      %36 = sbr.rel (0) target = $region41
    $region40: #{tpu_custom_call.1} parent=1 // pred_region
      _
    $region41: #{tpu_custom_call.1} parent=1 // pred_fallthru
      _
    // Predicated region
    $region42: #{tpu_custom_call.1} parent=1 // pred_check
      _
    $region43: #{tpu_custom_call.1} parent=1 // pred_check_branch
      %38 = sbr.rel (0) target = $region45
    $region44: #{tpu_custom_call.1} parent=1 // pred_region
      _
    $region45: #{tpu_custom_call.1} parent=1 // pred_fallthru
      _
    %v40 = vld [vmem:[%s0] sm:$0xff]
    %v41 = vld [vmem:[%s0 + $0x8] sm:$0xff]
    %v42 = vld [vmem:[%s0 + $0x10] sm:$0xff]
    %v43 = vld [vmem:[%s0 + $0x18] sm:$0xff]
    %v44 = vld [vmem:[%s0 + $0x20] sm:$0xff]
    %v45 = vld [vmem:[%s0 + $0x28] sm:$0xff]
    %v46 = vld [vmem:[%s0 + $0x30] sm:$0xff]
    %v47 = vld [vmem:[%s0 + $0x38] sm:$0xff]
    %v48 = vld [vmem:[%s0 + $0x40] sm:$0xff]
    %v49 = vld [vmem:[%s0 + $0x48] sm:$0xff]
    %v50 = vld [vmem:[%s0 + $0x50] sm:$0xff]
    %v51 = vld [vmem:[%s0 + $0x58] sm:$0xff]
    %v52 = vld [vmem:[%s0 + $0x60] sm:$0xff]
    %v53 = vld [vmem:[%s0 + $0x68] sm:$0xff]
    %v54 = vld [vmem:[%s0 + $0x70] sm:$0xff]
    %v55 = vld [vmem:[%s0 + $0x78] sm:$0xff]
    %v56 = vld [vmem:[%s0 + $0x80] sm:$0xff]
    %v57 = vld [vmem:[%s0 + $0x88] sm:$0xff]
    %v58 = vld [vmem:[%s0 + $0x90] sm:$0xff]
    %v59 = vld [vmem:[%s0 + $0x98] sm:$0xff]
    %v60 = vld [vmem:[%s0 + $0xa0] sm:$0xff]
    %v61 = vld [vmem:[%s0 + $0xa8] sm:$0xff]
    %v62 = vld [vmem:[%s0 + $0xb0] sm:$0xff]
    %v63 = vld [vmem:[%s0 + $0xb8] sm:$0xff]
    %v64 = vld [vmem:[%s0 + $0xc0] sm:$0xff]
    %v65 = vld [vmem:[%s0 + $0xc8] sm:$0xff]
    %v66 = vld [vmem:[%s0 + $0xd0] sm:$0xff]
    %v67 = vld [vmem:[%s0 + $0xd8] sm:$0xff]
    %v68 = vld [vmem:[%s0 + $0xe0] sm:$0xff]
    %v69 = vld [vmem:[%s0 + $0xe8] sm:$0xff]
    %v70 = vld [vmem:[%s0 + $0xf0] sm:$0xff]
    %v71 = vld [vmem:[%s0 + $0xf8] sm:$0xff]
    %v72 = vpack.c.bf16 %v41, %v40
    %v73 = vpack.c.bf16 %v43, %v42
    %v74 = vpack.c.bf16 %v45, %v44
    %v75 = vpack.c.bf16 %v47, %v46
    %v76 = vpack.c.bf16 %v49, %v48
    %v77 = vpack.c.bf16 %v51, %v50
    %v78 = vpack.c.bf16 %v53, %v52
    %v79 = vpack.c.bf16 %v55, %v54
    %v80 = vpack.c.bf16 %v57, %v56
    %v81 = vpack.c.bf16 %v59, %v58
    %v82 = vpack.c.bf16 %v61, %v60
    %v83 = vpack.c.bf16 %v63, %v62
    %v84 = vpack.c.bf16 %v65, %v64
    %v85 = vpack.c.bf16 %v67, %v66
    %v86 = vpack.c.bf16 %v69, %v68
    %v87 = vpack.c.bf16 %v71, %v70
    %v88 = vld [vmem:[%s1] sm:$0xff]
    %v89 = vld [vmem:[%s1 + $0x8] sm:$0xff]
    %v90 = vld [vmem:[%s1 + $0x10] sm:$0xff]
    %v91 = vld [vmem:[%s1 + $0x18] sm:$0xff]
    %v92 = vld [vmem:[%s2] sm:$0x3]
    %v94 = vlaneseq
    %v95 = vshrl.u32 %v94, 7
    %v96 = vsub.s32 0, %v95
    %v97 = vrot.slane %v92, %v96
    %v98 = vlaneseq
    %v99 = vshrl.u32 %v98, 7
    %v100 = vsub.s32 1, %v99
    %v101 = vrot.slane %v92, %v100
    %v108 = vunpack.c.l.b16 %v88
    %v109 = vunpack.c.h.b16 %v88
    %v110 = vunpack.c.l.b16 %v89
    %v111 = vunpack.c.h.b16 %v89
    %v112 = vunpack.c.l.b16 %v90
    %v113 = vunpack.c.h.b16 %v90
    %v114 = vunpack.c.l.b16 %v91
    %v115 = vunpack.c.h.b16 %v91
    %v116 = vpack.c.b16 %v110, %v108
    %v117 = vpack.c.b16 %v111, %v109
    %v118 = vpack.c.b16 %v114, %v112
    %v119 = vpack.c.b16 %v115, %v113
    %vm124 = vcmask 261120
    %v126 = vsel %vm124, %v72, 0
    %v129 = vsel %vm124, %v73, 0
    %v132 = vsel %vm124, %v74, 0
    %v135 = vsel %vm124, %v75, 0
    %v138 = vsel %vm124, %v76, 0
    %v141 = vsel %vm124, %v77, 0
    %v144 = vsel %vm124, %v78, 0
    %v147 = vsel %vm124, %v79, 0
    %v150 = vsel %vm124, %v80, 0
    %v153 = vsel %vm124, %v81, 0
    %v156 = vsel %vm124, %v82, 0
    %v159 = vsel %vm124, %v83, 0
    %v162 = vsel %vm124, %v84, 0
    %v165 = vsel %vm124, %v85, 0
    %v168 = vsel %vm124, %v86, 0
    %v171 = vsel %vm124, %v87, 0
    %173 = vmatprep.subr.bf16.mxu0 0
    %174 = vmatpush1.bf16.msra.mxu0 0
    %175 = vmatprep.subr.bf16.mxu0 0
    %176 = vmatpush1.bf16.msra.mxu0 0
    %177 = vmatprep.subr.bf16.mxu0 0
    %178 = vmatpush1.bf16.msra.mxu0 0
    %179 = vmatprep.subr.bf16.mxu0 0
    %180 = vmatpush1.bf16.msra.mxu0 0
    %181 = vmatprep.subr.bf16.mxu0 0
    %182 = vmatpush1.bf16.msra.mxu0 0
    %183 = vmatprep.subr.bf16.mxu0 0
    %184 = vmatpush1.bf16.msra.mxu0 0
    %185 = vmatprep.subr.bf16.mxu0 %v119
    %186 = vmatpush1.bf16.msra.mxu0 %v118
    %187 = vmatprep.subr.bf16.mxu0 %v117
    %188 = vmatpush1.bf16.msra.mxu0 %v116
    %189 = vmatprep.subr.bf16.mxu0 0
    %190 = vmatpush2.bf16.msra.mxu0 0
    %191 = vmatprep.subr.bf16.mxu0 0
    %192 = vmatpush2.bf16.msra.mxu0 0
    %193 = vmatprep.subr.bf16.mxu0 0
    %194 = vmatpush2.bf16.msra.mxu0 0
    %195 = vmatprep.subr.bf16.mxu0 0
    %196 = vmatpush2.bf16.msra.mxu0 0
    %197 = vmatprep.subr.bf16.mxu0 0
    %198 = vmatpush2.bf16.msra.mxu0 0
    %199 = vmatprep.subr.bf16.mxu0 0
    %200 = vmatpush2.bf16.msra.mxu0 0
    %201 = vmatprep.subr.bf16.mxu0 0
    %202 = vmatpush2.bf16.msra.mxu0 0
    %203 = vmatprep.subr.bf16.mxu0 0
    %204 = vmatpush2.bf16.msra.mxu0 0
    %205 = vmatprep.mubr.bf16.mxu0 0
    %206 = vmatmul.mubr.bf16.gmra.mxu0 %v126
    %v207 = vpop.f32.mrf.mxu0
    %v208 = vadd.f32 %v97, %v207
    %v209 = vpop.f32.mrf.mxu0
    %v210 = vadd.f32 %v101, %v209
    %v211 = vpop.f32.mrf.mxu0
    %v212 = vadd.f32 %v97, %v211
    %v213 = vpop.f32.mrf.mxu0
    %v214 = vadd.f32 %v101, %v213
    %215 = vmatprep.mubr.bf16.mxu0 0
    %216 = vmatmul.mubr.bf16.gmra.mxu0 %v129
    %v217 = vpop.f32.mrf.mxu0
    %v218 = vadd.f32 %v97, %v217
    %v219 = vpop.f32.mrf.mxu0
    %v220 = vadd.f32 %v101, %v219
    %v221 = vpop.f32.mrf.mxu0
    %v222 = vadd.f32 %v97, %v221
    %v223 = vpop.f32.mrf.mxu0
    %v224 = vadd.f32 %v101, %v223
    %225 = vmatprep.mubr.bf16.mxu0 0
    %226 = vmatmul.mubr.bf16.gmra.mxu0 %v132
    %v227 = vpop.f32.mrf.mxu0
    %v228 = vadd.f32 %v97, %v227
    %v229 = vpop.f32.mrf.mxu0
    %v230 = vadd.f32 %v101, %v229
    %v231 = vpop.f32.mrf.mxu0
    %v232 = vadd.f32 %v97, %v231
    %v233 = vpop.f32.mrf.mxu0
    %v234 = vadd.f32 %v101, %v233
    %235 = vmatprep.mubr.bf16.mxu0 0
    %236 = vmatmul.mubr.bf16.gmra.mxu0 %v135
    %v237 = vpop.f32.mrf.mxu0
    %v238 = vadd.f32 %v97, %v237
    %v239 = vpop.f32.mrf.mxu0
    %v240 = vadd.f32 %v101, %v239
    %v241 = vpop.f32.mrf.mxu0
    %v242 = vadd.f32 %v97, %v241
    %v243 = vpop.f32.mrf.mxu0
    %v244 = vadd.f32 %v101, %v243
    %245 = vmatprep.mubr.bf16.mxu0 0
    %246 = vmatmul.mubr.bf16.gmra.mxu0 %v138
    %v247 = vpop.f32.mrf.mxu0
    %v248 = vadd.f32 %v97, %v247
    %v249 = vpop.f32.mrf.mxu0
    %v250 = vadd.f32 %v101, %v249
    %v251 = vpop.f32.mrf.mxu0
    %v252 = vadd.f32 %v97, %v251
    %v253 = vpop.f32.mrf.mxu0
    %v254 = vadd.f32 %v101, %v253
    %255 = vmatprep.mubr.bf16.mxu0 0
    %256 = vmatmul.mubr.bf16.gmra.mxu0 %v141
    %v257 = vpop.f32.mrf.mxu0
    %v258 = vadd.f32 %v97, %v257
    %v259 = vpop.f32.mrf.mxu0
    %v260 = vadd.f32 %v101, %v259
    %v261 = vpop.f32.mrf.mxu0
    %v262 = vadd.f32 %v97, %v261
    %v263 = vpop.f32.mrf.mxu0
    %v264 = vadd.f32 %v101, %v263
    %265 = vmatprep.mubr.bf16.mxu0 0
    %266 = vmatmul.mubr.bf16.gmra.mxu0 %v144
    %v267 = vpop.f32.mrf.mxu0
    %v268 = vadd.f32 %v97, %v267
    %v269 = vpop.f32.mrf.mxu0
    %v270 = vadd.f32 %v101, %v269
    %v271 = vpop.f32.mrf.mxu0
    %v272 = vadd.f32 %v97, %v271
    %v273 = vpop.f32.mrf.mxu0
    %v274 = vadd.f32 %v101, %v273
    %275 = vmatprep.mubr.bf16.mxu0 0
    %276 = vmatmul.mubr.bf16.gmra.mxu0 %v147
    %v277 = vpop.f32.mrf.mxu0
    %v278 = vadd.f32 %v97, %v277
    %v279 = vpop.f32.mrf.mxu0
    %v280 = vadd.f32 %v101, %v279
    %v281 = vpop.f32.mrf.mxu0
    %v282 = vadd.f32 %v97, %v281
    %v283 = vpop.f32.mrf.mxu0
    %v284 = vadd.f32 %v101, %v283
    %285 = vmatprep.mubr.bf16.mxu0 0
    %286 = vmatmul.mubr.bf16.gmra.mxu0 %v150
    %v287 = vpop.f32.mrf.mxu0
    %v288 = vadd.f32 %v97, %v287
    %v289 = vpop.f32.mrf.mxu0
    %v290 = vadd.f32 %v101, %v289
    %v291 = vpop.f32.mrf.mxu0
    %v292 = vadd.f32 %v97, %v291
    %v293 = vpop.f32.mrf.mxu0
    %v294 = vadd.f32 %v101, %v293
    %295 = vmatprep.mubr.bf16.mxu0 0
    %296 = vmatmul.mubr.bf16.gmra.mxu0 %v153
    %v297 = vpop.f32.mrf.mxu0
    %v298 = vadd.f32 %v97, %v297
    %v299 = vpop.f32.mrf.mxu0
    %v300 = vadd.f32 %v101, %v299
    %v301 = vpop.f32.mrf.mxu0
    %v302 = vadd.f32 %v97, %v301
    %v303 = vpop.f32.mrf.mxu0
    %v304 = vadd.f32 %v101, %v303
    %305 = vmatprep.mubr.bf16.mxu0 0
    %306 = vmatmul.mubr.bf16.gmra.mxu0 %v156
    %v307 = vpop.f32.mrf.mxu0
    %v308 = vadd.f32 %v97, %v307
    %v309 = vpop.f32.mrf.mxu0
    %v310 = vadd.f32 %v101, %v309
    %v311 = vpop.f32.mrf.mxu0
    %v312 = vadd.f32 %v97, %v311
    %v313 = vpop.f32.mrf.mxu0
    %v314 = vadd.f32 %v101, %v313
    %315 = vmatprep.mubr.bf16.mxu0 0
    %316 = vmatmul.mubr.bf16.gmra.mxu0 %v159
    %v317 = vpop.f32.mrf.mxu0
    %v318 = vadd.f32 %v97, %v317
    %v319 = vpop.f32.mrf.mxu0
    %v320 = vadd.f32 %v101, %v319
    %v321 = vpop.f32.mrf.mxu0
    %v322 = vadd.f32 %v97, %v321
    %v323 = vpop.f32.mrf.mxu0
    %v324 = vadd.f32 %v101, %v323
    %325 = vmatprep.mubr.bf16.mxu0 0
    %326 = vmatmul.mubr.bf16.gmra.mxu0 %v162
    %v327 = vpop.f32.mrf.mxu0
    %v328 = vadd.f32 %v97, %v327
    %v329 = vpop.f32.mrf.mxu0
    %v330 = vadd.f32 %v101, %v329
    %v331 = vpop.f32.mrf.mxu0
    %v332 = vadd.f32 %v97, %v331
    %v333 = vpop.f32.mrf.mxu0
    %v334 = vadd.f32 %v101, %v333
    %335 = vmatprep.mubr.bf16.mxu0 0
    %336 = vmatmul.mubr.bf16.gmra.mxu0 %v165
    %v337 = vpop.f32.mrf.mxu0
    %v338 = vadd.f32 %v97, %v337
    %v339 = vpop.f32.mrf.mxu0
    %v340 = vadd.f32 %v101, %v339
    %v341 = vpop.f32.mrf.mxu0
    %v342 = vadd.f32 %v97, %v341
    %v343 = vpop.f32.mrf.mxu0
    %v344 = vadd.f32 %v101, %v343
    %345 = vmatprep.mubr.bf16.mxu0 0
    %346 = vmatmul.mubr.bf16.gmra.mxu0 %v168
    %v347 = vpop.f32.mrf.mxu0
    %v348 = vadd.f32 %v97, %v347
    %v349 = vpop.f32.mrf.mxu0
    %v350 = vadd.f32 %v101, %v349
    %v351 = vpop.f32.mrf.mxu0
    %v352 = vadd.f32 %v97, %v351
    %v353 = vpop.f32.mrf.mxu0
    %v354 = vadd.f32 %v101, %v353
    %355 = vmatprep.mubr.bf16.mxu0 0
    %356 = vmatmul.mubr.bf16.gmra.mxu0 %v171
    %v357 = vpop.f32.mrf.mxu0
    %v358 = vadd.f32 %v97, %v357
    %v359 = vpop.f32.mrf.mxu0
    %v360 = vadd.f32 %v101, %v359
    %v361 = vpop.f32.mrf.mxu0
    %v362 = vadd.f32 %v97, %v361
    %v363 = vpop.f32.mrf.mxu0
    %v364 = vadd.f32 %v101, %v363
    %365 = vdwg.mxu0
    %v366 = vmax.f32 %v208, 0.0
    %v367 = vmax.f32 %v210, 0.0
    %v368 = vmax.f32 %v212, 0.0
    %v369 = vmax.f32 %v214, 0.0
    %v370 = vmax.f32 %v218, 0.0
    %v371 = vmax.f32 %v220, 0.0
    %v372 = vmax.f32 %v222, 0.0
    %v373 = vmax.f32 %v224, 0.0
    %v374 = vmax.f32 %v228, 0.0
    %v375 = vmax.f32 %v230, 0.0
    %v376 = vmax.f32 %v232, 0.0
    %v377 = vmax.f32 %v234, 0.0
    %v378 = vmax.f32 %v238, 0.0
    %v379 = vmax.f32 %v240, 0.0
    %v380 = vmax.f32 %v242, 0.0
    %v381 = vmax.f32 %v244, 0.0
    %v382 = vmax.f32 %v248, 0.0
    %v383 = vmax.f32 %v250, 0.0
    %v384 = vmax.f32 %v252, 0.0
    %v385 = vmax.f32 %v254, 0.0
    %v386 = vmax.f32 %v258, 0.0
    %v387 = vmax.f32 %v260, 0.0
    %v388 = vmax.f32 %v262, 0.0
    %v389 = vmax.f32 %v264, 0.0
    %v390 = vmax.f32 %v268, 0.0
    %v391 = vmax.f32 %v270, 0.0
    %v392 = vmax.f32 %v272, 0.0
    %v393 = vmax.f32 %v274, 0.0
    %v394 = vmax.f32 %v278, 0.0
    %v395 = vmax.f32 %v280, 0.0
    %v396 = vmax.f32 %v282, 0.0
    %v397 = vmax.f32 %v284, 0.0
    %v398 = vmax.f32 %v288, 0.0
    %v399 = vmax.f32 %v290, 0.0
    %v400 = vmax.f32 %v292, 0.0
    %v401 = vmax.f32 %v294, 0.0
    %v402 = vmax.f32 %v298, 0.0
    %v403 = vmax.f32 %v300, 0.0
    %v404 = vmax.f32 %v302, 0.0
    %v405 = vmax.f32 %v304, 0.0
    %v406 = vmax.f32 %v308, 0.0
    %v407 = vmax.f32 %v310, 0.0
    %v408 = vmax.f32 %v312, 0.0
    %v409 = vmax.f32 %v314, 0.0
    %v410 = vmax.f32 %v318, 0.0
    %v411 = vmax.f32 %v320, 0.0
    %v412 = vmax.f32 %v322, 0.0
    %v413 = vmax.f32 %v324, 0.0
    %v414 = vmax.f32 %v328, 0.0
    %v415 = vmax.f32 %v330, 0.0
    %v416 = vmax.f32 %v332, 0.0
    %v417 = vmax.f32 %v334, 0.0
    %v418 = vmax.f32 %v338, 0.0
    %v419 = vmax.f32 %v340, 0.0
    %v420 = vmax.f32 %v342, 0.0
    %v421 = vmax.f32 %v344, 0.0
    %v422 = vmax.f32 %v348, 0.0
    %v423 = vmax.f32 %v350, 0.0
    %v424 = vmax.f32 %v352, 0.0
    %v425 = vmax.f32 %v354, 0.0
    %v426 = vmax.f32 %v358, 0.0
    %v427 = vmax.f32 %v360, 0.0
    %v428 = vmax.f32 %v362, 0.0
    %v429 = vmax.f32 %v364, 0.0
    %v430 = vpack.c.bf16 %v368, %v366
    %v431 = vpack.c.bf16 %v369, %v367
    %v432 = vpack.c.bf16 %v372, %v370
    %v433 = vpack.c.bf16 %v373, %v371
    %v434 = vpack.c.bf16 %v376, %v374
    %v435 = vpack.c.bf16 %v377, %v375
    %v436 = vpack.c.bf16 %v380, %v378
    %v437 = vpack.c.bf16 %v381, %v379
    %v438 = vpack.c.bf16 %v384, %v382
    %v439 = vpack.c.bf16 %v385, %v383
    %v440 = vpack.c.bf16 %v388, %v386
    %v441 = vpack.c.bf16 %v389, %v387
    %v442 = vpack.c.bf16 %v392, %v390
    %v443 = vpack.c.bf16 %v393, %v391
    %v444 = vpack.c.bf16 %v396, %v394
    %v445 = vpack.c.bf16 %v397, %v395
    %v446 = vpack.c.bf16 %v400, %v398
    %v447 = vpack.c.bf16 %v401, %v399
    %v448 = vpack.c.bf16 %v404, %v402
    %v449 = vpack.c.bf16 %v405, %v403
    %v450 = vpack.c.bf16 %v408, %v406
    %v451 = vpack.c.bf16 %v409, %v407
    %v452 = vpack.c.bf16 %v412, %v410
    %v453 = vpack.c.bf16 %v413, %v411
    %v454 = vpack.c.bf16 %v416, %v414
    %v455 = vpack.c.bf16 %v417, %v415
    %v456 = vpack.c.bf16 %v420, %v418
    %v457 = vpack.c.bf16 %v421, %v419
    %v458 = vpack.c.bf16 %v424, %v422
    %v459 = vpack.c.bf16 %v425, %v423
    %v460 = vpack.c.bf16 %v428, %v426
    %v461 = vpack.c.bf16 %v429, %v427
    %v462 = vld [vmem:[%s3] sm:$0xf]
    %v463 = vld [vmem:[%s3 + $0x4] sm:$0xf]
    %v464 = vld [vmem:[%s3 + $0x8] sm:$0xf]
    %v465 = vld [vmem:[%s3 + $0xc] sm:$0xf]
    %v466 = vld [vmem:[%s3 + $0x10] sm:$0xf]
    %v467 = vld [vmem:[%s3 + $0x14] sm:$0xf]
    %v468 = vld [vmem:[%s3 + $0x18] sm:$0xf]
    %v469 = vld [vmem:[%s3 + $0x1c] sm:$0xf]
    %v470 = vld [vmem:[%s3 + $0x20] sm:$0xf]
    %v471 = vld [vmem:[%s3 + $0x24] sm:$0xf]
    %v472 = vld [vmem:[%s3 + $0x28] sm:$0xf]
    %v473 = vld [vmem:[%s3 + $0x2c] sm:$0xf]
    %v474 = vld [vmem:[%s3 + $0x30] sm:$0xf]
    %v475 = vld [vmem:[%s3 + $0x34] sm:$0xf]
    %v476 = vld [vmem:[%s3 + $0x38] sm:$0xf]
    %v477 = vld [vmem:[%s3 + $0x3c] sm:$0xf]
    %v478 = vld [vmem:[%s3 + $0x40] sm:$0xf]
    %v479 = vld [vmem:[%s3 + $0x44] sm:$0xf]
    %v480 = vld [vmem:[%s3 + $0x48] sm:$0xf]
    %v481 = vld [vmem:[%s3 + $0x4c] sm:$0xf]
    %v482 = vld [vmem:[%s3 + $0x50] sm:$0xf]
    %v483 = vld [vmem:[%s3 + $0x54] sm:$0xf]
    %v484 = vld [vmem:[%s3 + $0x58] sm:$0xf]
    %v485 = vld [vmem:[%s3 + $0x5c] sm:$0xf]
    %v486 = vld [vmem:[%s3 + $0x60] sm:$0xf]
    %v487 = vld [vmem:[%s3 + $0x64] sm:$0xf]
    %v488 = vld [vmem:[%s3 + $0x68] sm:$0xf]
    %v489 = vld [vmem:[%s3 + $0x6c] sm:$0xf]
    %v490 = vld [vmem:[%s3 + $0x70] sm:$0xf]
    %v491 = vld [vmem:[%s3 + $0x74] sm:$0xf]
    %v492 = vld [vmem:[%s3 + $0x78] sm:$0xf]
    %v493 = vld [vmem:[%s3 + $0x7c] sm:$0xf]
    %v494 = vld [vmem:[%s4] sm:$0x1]
    %v496 = vlaneseq
    %v497 = vshrl.u32 %v496, 7
    %v498 = vsub.s32 0, %v497
    %v499 = vrot.slane %v494, %v498
    %v533 = vunpack.c.l.b16 %v462
    %v534 = vunpack.c.l.b16 %v463
    %v535 = vunpack.c.l.b16 %v464
    %v536 = vunpack.c.l.b16 %v465
    %v537 = vunpack.c.l.b16 %v466
    %v538 = vunpack.c.l.b16 %v467
    %v539 = vunpack.c.l.b16 %v468
    %v540 = vunpack.c.l.b16 %v469
    %v541 = vunpack.c.l.b16 %v470
    %v542 = vunpack.c.l.b16 %v471
    %v543 = vunpack.c.l.b16 %v472
    %v544 = vunpack.c.l.b16 %v473
    %v545 = vunpack.c.l.b16 %v474
    %v546 = vunpack.c.l.b16 %v475
    %v547 = vunpack.c.l.b16 %v476
    %v548 = vunpack.c.l.b16 %v477
    %v549 = vunpack.c.l.b16 %v478
    %v550 = vunpack.c.l.b16 %v479
    %v551 = vunpack.c.l.b16 %v480
    %v552 = vunpack.c.l.b16 %v481
    %v553 = vunpack.c.l.b16 %v482
    %v554 = vunpack.c.l.b16 %v483
    %v555 = vunpack.c.l.b16 %v484
    %v556 = vunpack.c.l.b16 %v485
    %v557 = vunpack.c.l.b16 %v486
    %v558 = vunpack.c.l.b16 %v487
    %v559 = vunpack.c.l.b16 %v488
    %v560 = vunpack.c.l.b16 %v489
    %v561 = vunpack.c.l.b16 %v490
    %v562 = vunpack.c.l.b16 %v491
    %v563 = vunpack.c.l.b16 %v492
    %v564 = vunpack.c.l.b16 %v493
    %v565 = vpack.c.b16 %v534, %v533
    %v566 = vpack.c.b16 %v536, %v535
    %v567 = vpack.c.b16 %v538, %v537
    %v568 = vpack.c.b16 %v540, %v539
    %v569 = vpack.c.b16 %v542, %v541
    %v570 = vpack.c.b16 %v544, %v543
    %v571 = vpack.c.b16 %v546, %v545
    %v572 = vpack.c.b16 %v548, %v547
    %v573 = vpack.c.b16 %v550, %v549
    %v574 = vpack.c.b16 %v552, %v551
    %v575 = vpack.c.b16 %v554, %v553
    %v576 = vpack.c.b16 %v556, %v555
    %v577 = vpack.c.b16 %v558, %v557
    %v578 = vpack.c.b16 %v560, %v559
    %v579 = vpack.c.b16 %v562, %v561
    %v580 = vpack.c.b16 %v564, %v563
    %597 = vmatprep.subr.bf16.mxu0 0
    %598 = vmatpush1.bf16.msra.mxu0 %v572
    %599 = vmatprep.subr.bf16.mxu0 0
    %600 = vmatpush1.bf16.msra.mxu0 %v571
    %601 = vmatprep.subr.bf16.mxu0 0
    %602 = vmatpush1.bf16.msra.mxu0 %v570
    %603 = vmatprep.subr.bf16.mxu0 0
    %604 = vmatpush1.bf16.msra.mxu0 %v569
    %605 = vmatprep.subr.bf16.mxu0 0
    %606 = vmatpush1.bf16.msra.mxu0 %v568
    %607 = vmatprep.subr.bf16.mxu0 0
    %608 = vmatpush1.bf16.msra.mxu0 %v567
    %609 = vmatprep.subr.bf16.mxu0 0
    %610 = vmatpush1.bf16.msra.mxu0 %v566
    %611 = vmatprep.subr.bf16.mxu0 0
    %612 = vmatpush1.bf16.msra.mxu0 %v565
    %613 = vmatprep.subr.bf16.mxu0 0
    %614 = vmatpush2.bf16.msra.mxu0 %v580
    %615 = vmatprep.subr.bf16.mxu0 0
    %616 = vmatpush2.bf16.msra.mxu0 %v579
    %617 = vmatprep.subr.bf16.mxu0 0
    %618 = vmatpush2.bf16.msra.mxu0 %v578
    %619 = vmatprep.subr.bf16.mxu0 0
    %620 = vmatpush2.bf16.msra.mxu0 %v577
    %621 = vmatprep.subr.bf16.mxu0 0
    %622 = vmatpush2.bf16.msra.mxu0 %v576
    %623 = vmatprep.subr.bf16.mxu0 0
    %624 = vmatpush2.bf16.msra.mxu0 %v575
    %625 = vmatprep.subr.bf16.mxu0 0
    %626 = vmatpush2.bf16.msra.mxu0 %v574
    %627 = vmatprep.subr.bf16.mxu0 0
    %628 = vmatpush2.bf16.msra.mxu0 %v573
    %629 = vmatprep.mubr.bf16.mxu0 %v431
    %630 = vmatmul.mubr.bf16.gmra.mxu0 %v430
    %v631 = vpop.f32.mrf.mxu0
    %v632 = vadd.f32 %v499, %v631
    %v633 = vpop.f32.mrf.mxu0
    %v634 = vpop.f32.mrf.mxu0
    %v635 = vadd.f32 %v499, %v634
    %v636 = vpop.f32.mrf.mxu0
    %637 = vmatprep.mubr.bf16.mxu0 %v433
    %638 = vmatmul.mubr.bf16.gmra.mxu0 %v432
    %v639 = vpop.f32.mrf.mxu0
    %v640 = vadd.f32 %v499, %v639
    %v641 = vpop.f32.mrf.mxu0
    %v642 = vpop.f32.mrf.mxu0
    %v643 = vadd.f32 %v499, %v642
    %v644 = vpop.f32.mrf.mxu0
    %645 = vmatprep.mubr.bf16.mxu0 %v435
    %646 = vmatmul.mubr.bf16.gmra.mxu0 %v434
    %v647 = vpop.f32.mrf.mxu0
    %v648 = vadd.f32 %v499, %v647
    %v649 = vpop.f32.mrf.mxu0
    %v650 = vpop.f32.mrf.mxu0
    %v651 = vadd.f32 %v499, %v650
    %v652 = vpop.f32.mrf.mxu0
    %653 = vmatprep.mubr.bf16.mxu0 %v437
    %654 = vmatmul.mubr.bf16.gmra.mxu0 %v436
    %v655 = vpop.f32.mrf.mxu0
    %v656 = vadd.f32 %v499, %v655
    %v657 = vpop.f32.mrf.mxu0
    %v658 = vpop.f32.mrf.mxu0
    %v659 = vadd.f32 %v499, %v658
    %v660 = vpop.f32.mrf.mxu0
    %661 = vmatprep.mubr.bf16.mxu0 %v439
    %662 = vmatmul.mubr.bf16.gmra.mxu0 %v438
    %v663 = vpop.f32.mrf.mxu0
    %v664 = vadd.f32 %v499, %v663
    %v665 = vpop.f32.mrf.mxu0
    %v666 = vpop.f32.mrf.mxu0
    %v667 = vadd.f32 %v499, %v666
    %v668 = vpop.f32.mrf.mxu0
    %669 = vmatprep.mubr.bf16.mxu0 %v441
    %670 = vmatmul.mubr.bf16.gmra.mxu0 %v440
    %v671 = vpop.f32.mrf.mxu0
    %v672 = vadd.f32 %v499, %v671
    %v673 = vpop.f32.mrf.mxu0
    %v674 = vpop.f32.mrf.mxu0
    %v675 = vadd.f32 %v499, %v674
    %v676 = vpop.f32.mrf.mxu0
    %677 = vmatprep.mubr.bf16.mxu0 %v443
    %678 = vmatmul.mubr.bf16.gmra.mxu0 %v442
    %v679 = vpop.f32.mrf.mxu0
    %v680 = vadd.f32 %v499, %v679
    %v681 = vpop.f32.mrf.mxu0
    %v682 = vpop.f32.mrf.mxu0
    %v683 = vadd.f32 %v499, %v682
    %v684 = vpop.f32.mrf.mxu0
    %685 = vmatprep.mubr.bf16.mxu0 %v445
    %686 = vmatmul.mubr.bf16.gmra.mxu0 %v444
    %v687 = vpop.f32.mrf.mxu0
    %v688 = vadd.f32 %v499, %v687
    %v689 = vpop.f32.mrf.mxu0
    %v690 = vpop.f32.mrf.mxu0
    %v691 = vadd.f32 %v499, %v690
    %v692 = vpop.f32.mrf.mxu0
    %693 = vmatprep.mubr.bf16.mxu0 %v447
    %694 = vmatmul.mubr.bf16.gmra.mxu0 %v446
    %v695 = vpop.f32.mrf.mxu0
    %v696 = vadd.f32 %v499, %v695
    %v697 = vpop.f32.mrf.mxu0
    %v698 = vpop.f32.mrf.mxu0
    %v699 = vadd.f32 %v499, %v698
    %v700 = vpop.f32.mrf.mxu0
    %701 = vmatprep.mubr.bf16.mxu0 %v449
    %702 = vmatmul.mubr.bf16.gmra.mxu0 %v448
    %v703 = vpop.f32.mrf.mxu0
    %v704 = vadd.f32 %v499, %v703
    %v705 = vpop.f32.mrf.mxu0
    %v706 = vpop.f32.mrf.mxu0
    %v707 = vadd.f32 %v499, %v706
    %v708 = vpop.f32.mrf.mxu0
    %709 = vmatprep.mubr.bf16.mxu0 %v451
    %710 = vmatmul.mubr.bf16.gmra.mxu0 %v450
    %v711 = vpop.f32.mrf.mxu0
    %v712 = vadd.f32 %v499, %v711
    %v713 = vpop.f32.mrf.mxu0
    %v714 = vpop.f32.mrf.mxu0
    %v715 = vadd.f32 %v499, %v714
    %v716 = vpop.f32.mrf.mxu0
    %717 = vmatprep.mubr.bf16.mxu0 %v453
    %718 = vmatmul.mubr.bf16.gmra.mxu0 %v452
    %v719 = vpop.f32.mrf.mxu0
    %v720 = vadd.f32 %v499, %v719
    %v721 = vpop.f32.mrf.mxu0
    %v722 = vpop.f32.mrf.mxu0
    %v723 = vadd.f32 %v499, %v722
    %v724 = vpop.f32.mrf.mxu0
    %725 = vmatprep.mubr.bf16.mxu0 %v455
    %726 = vmatmul.mubr.bf16.gmra.mxu0 %v454
    %v727 = vpop.f32.mrf.mxu0
    %v728 = vadd.f32 %v499, %v727
    %v729 = vpop.f32.mrf.mxu0
    %v730 = vpop.f32.mrf.mxu0
    %v731 = vadd.f32 %v499, %v730
    %v732 = vpop.f32.mrf.mxu0
    %733 = vmatprep.mubr.bf16.mxu0 %v457
    %734 = vmatmul.mubr.bf16.gmra.mxu0 %v456
    %v735 = vpop.f32.mrf.mxu0
    %v736 = vadd.f32 %v499, %v735
    %v737 = vpop.f32.mrf.mxu0
    %v738 = vpop.f32.mrf.mxu0
    %v739 = vadd.f32 %v499, %v738
    %v740 = vpop.f32.mrf.mxu0
    %741 = vmatprep.mubr.bf16.mxu0 %v459
    %742 = vmatmul.mubr.bf16.gmra.mxu0 %v458
    %v743 = vpop.f32.mrf.mxu0
    %v744 = vadd.f32 %v499, %v743
    %v745 = vpop.f32.mrf.mxu0
    %v746 = vpop.f32.mrf.mxu0
    %v747 = vadd.f32 %v499, %v746
    %v748 = vpop.f32.mrf.mxu0
    %749 = vmatprep.mubr.bf16.mxu0 %v461
    %750 = vmatmul.mubr.bf16.gmra.mxu0 %v460
    %v751 = vpop.f32.mrf.mxu0
    %v752 = vadd.f32 %v499, %v751
    %v753 = vpop.f32.mrf.mxu0
    %v754 = vpop.f32.mrf.mxu0
    %v755 = vadd.f32 %v499, %v754
    %v756 = vpop.f32.mrf.mxu0
    %757 = vdwg.mxu0
    %v758 = vmax.f32 %v632, 0.0
    %v759 = vmax.f32 %v635, 0.0
    %v760 = vmax.f32 %v640, 0.0
    %v761 = vmax.f32 %v643, 0.0
    %v762 = vmax.f32 %v648, 0.0
    %v763 = vmax.f32 %v651, 0.0
    %v764 = vmax.f32 %v656, 0.0
    %v765 = vmax.f32 %v659, 0.0
    %v766 = vmax.f32 %v664, 0.0
    %v767 = vmax.f32 %v667, 0.0
    %v768 = vmax.f32 %v672, 0.0
    %v769 = vmax.f32 %v675, 0.0
    %v770 = vmax.f32 %v680, 0.0
    %v771 = vmax.f32 %v683, 0.0
    %v772 = vmax.f32 %v688, 0.0
    %v773 = vmax.f32 %v691, 0.0
    %v774 = vmax.f32 %v696, 0.0
    %v775 = vmax.f32 %v699, 0.0
    %v776 = vmax.f32 %v704, 0.0
    %v777 = vmax.f32 %v707, 0.0
    %v778 = vmax.f32 %v712, 0.0
    %v779 = vmax.f32 %v715, 0.0
    %v780 = vmax.f32 %v720, 0.0
    %v781 = vmax.f32 %v723, 0.0
    %v782 = vmax.f32 %v728, 0.0
    %v783 = vmax.f32 %v731, 0.0
    %v784 = vmax.f32 %v736, 0.0
    %v785 = vmax.f32 %v739, 0.0
    %v786 = vmax.f32 %v744, 0.0
    %v787 = vmax.f32 %v747, 0.0
    %v788 = vmax.f32 %v752, 0.0
    %v789 = vmax.f32 %v755, 0.0
    %v790 = vpack.c.bf16 %v759, %v758
    %v791 = vpack.c.bf16 %v761, %v760
    %v792 = vpack.c.bf16 %v763, %v762
    %v793 = vpack.c.bf16 %v765, %v764
    %v794 = vpack.c.bf16 %v767, %v766
    %v795 = vpack.c.bf16 %v769, %v768
    %v796 = vpack.c.bf16 %v771, %v770
    %v797 = vpack.c.bf16 %v773, %v772
    %v798 = vpack.c.bf16 %v775, %v774
    %v799 = vpack.c.bf16 %v777, %v776
    %v800 = vpack.c.bf16 %v779, %v778
    %v801 = vpack.c.bf16 %v781, %v780
    %v802 = vpack.c.bf16 %v783, %v782
    %v803 = vpack.c.bf16 %v785, %v784
    %v804 = vpack.c.bf16 %v787, %v786
    %v805 = vpack.c.bf16 %v789, %v788
    %v806 = vld [vmem:[%s5] sm:$0xf]
    %v807 = vld [vmem:[%s5 + $0x4] sm:$0xf]
    %v808 = vld [vmem:[%s5 + $0x8] sm:$0xf]
    %v809 = vld [vmem:[%s5 + $0xc] sm:$0xf]
    %v810 = vld [vmem:[%s5 + $0x10] sm:$0xf]
    %v811 = vld [vmem:[%s5 + $0x14] sm:$0xf]
    %v812 = vld [vmem:[%s5 + $0x18] sm:$0xf]
    %v813 = vld [vmem:[%s5 + $0x1c] sm:$0xf]
    %v814 = vld [vmem:[%s5 + $0x20] sm:$0xf]
    %v815 = vld [vmem:[%s5 + $0x24] sm:$0xf]
    %v816 = vld [vmem:[%s5 + $0x28] sm:$0xf]
    %v817 = vld [vmem:[%s5 + $0x2c] sm:$0xf]
    %v818 = vld [vmem:[%s5 + $0x30] sm:$0xf]
    %v819 = vld [vmem:[%s5 + $0x34] sm:$0xf]
    %v820 = vld [vmem:[%s5 + $0x38] sm:$0xf]
    %v821 = vld [vmem:[%s5 + $0x3c] sm:$0xf]
    %v822 = vld [vmem:[%s6] sm:$0x1]
    %v824 = vlaneseq
    %v825 = vshrl.u32 %v824, 7
    %v826 = vsub.s32 0, %v825
    %v827 = vrot.slane %v822, %v826
    %v845 = vunpack.c.l.b16 %v806
    %v846 = vunpack.c.l.b16 %v807
    %v847 = vunpack.c.l.b16 %v808
    %v848 = vunpack.c.l.b16 %v809
    %v849 = vunpack.c.l.b16 %v810
    %v850 = vunpack.c.l.b16 %v811
    %v851 = vunpack.c.l.b16 %v812
    %v852 = vunpack.c.l.b16 %v813
    %v853 = vunpack.c.l.b16 %v814
    %v854 = vunpack.c.l.b16 %v815
    %v855 = vunpack.c.l.b16 %v816
    %v856 = vunpack.c.l.b16 %v817
    %v857 = vunpack.c.l.b16 %v818
    %v858 = vunpack.c.l.b16 %v819
    %v859 = vunpack.c.l.b16 %v820
    %v860 = vunpack.c.l.b16 %v821
    %v861 = vpack.c.b16 %v846, %v845
    %v862 = vpack.c.b16 %v848, %v847
    %v863 = vpack.c.b16 %v850, %v849
    %v864 = vpack.c.b16 %v852, %v851
    %v865 = vpack.c.b16 %v854, %v853
    %v866 = vpack.c.b16 %v856, %v855
    %v867 = vpack.c.b16 %v858, %v857
    %v868 = vpack.c.b16 %v860, %v859
    %877 = vmatprep.subr.bf16.mxu0 0
    %878 = vmatpush1.bf16.msra.mxu0 %v868
    %879 = vmatprep.subr.bf16.mxu0 0
    %880 = vmatpush1.bf16.msra.mxu0 %v867
    %881 = vmatprep.subr.bf16.mxu0 0
    %882 = vmatpush1.bf16.msra.mxu0 %v866
    %883 = vmatprep.subr.bf16.mxu0 0
    %884 = vmatpush1.bf16.msra.mxu0 %v865
    %885 = vmatprep.subr.bf16.mxu0 0
    %886 = vmatpush1.bf16.msra.mxu0 %v864
    %887 = vmatprep.subr.bf16.mxu0 0
    %888 = vmatpush1.bf16.msra.mxu0 %v863
    %889 = vmatprep.subr.bf16.mxu0 0
    %890 = vmatpush1.bf16.msra.mxu0 %v862
    %891 = vmatprep.subr.bf16.mxu0 0
    %892 = vmatpush1.bf16.msra.mxu0 %v861
    %893 = vmatprep.subr.bf16.mxu0 0
    %894 = vmatpush2.bf16.msra.mxu0 0
    %895 = vmatprep.subr.bf16.mxu0 0
    %896 = vmatpush2.bf16.msra.mxu0 0
    %897 = vmatprep.subr.bf16.mxu0 0
    %898 = vmatpush2.bf16.msra.mxu0 0
    %899 = vmatprep.subr.bf16.mxu0 0
    %900 = vmatpush2.bf16.msra.mxu0 0
    %901 = vmatprep.subr.bf16.mxu0 0
    %902 = vmatpush2.bf16.msra.mxu0 0
    %903 = vmatprep.subr.bf16.mxu0 0
    %904 = vmatpush2.bf16.msra.mxu0 0
    %905 = vmatprep.subr.bf16.mxu0 0
    %906 = vmatpush2.bf16.msra.mxu0 0
    %907 = vmatprep.subr.bf16.mxu0 0
    %908 = vmatpush2.bf16.msra.mxu0 0
    %909 = vmatprep.mubr.bf16.mxu0 0
    %910 = vmatmul.mubr.bf16.gmra.mxu0 %v790
    %v911 = vpop.f32.mrf.mxu0
    %v912 = vadd.f32 %v827, %v911
    %v913 = vpop.f32.mrf.mxu0
    %v914 = vpop.f32.mrf.mxu0
    %v915 = vadd.f32 %v827, %v914
    %v916 = vpop.f32.mrf.mxu0
    %917 = vmatprep.mubr.bf16.mxu0 0
    %918 = vmatmul.mubr.bf16.gmra.mxu0 %v791
    %v919 = vpop.f32.mrf.mxu0
    %v920 = vadd.f32 %v827, %v919
    %v921 = vpop.f32.mrf.mxu0
    %v922 = vpop.f32.mrf.mxu0
    %v923 = vadd.f32 %v827, %v922
    %v924 = vpop.f32.mrf.mxu0
    %925 = vmatprep.mubr.bf16.mxu0 0
    %926 = vmatmul.mubr.bf16.gmra.mxu0 %v792
    %v927 = vpop.f32.mrf.mxu0
    %v928 = vadd.f32 %v827, %v927
    %v929 = vpop.f32.mrf.mxu0
    %v930 = vpop.f32.mrf.mxu0
    %v931 = vadd.f32 %v827, %v930
    %v932 = vpop.f32.mrf.mxu0
    %933 = vmatprep.mubr.bf16.mxu0 0
    %934 = vmatmul.mubr.bf16.gmra.mxu0 %v793
    %v935 = vpop.f32.mrf.mxu0
    %v936 = vadd.f32 %v827, %v935
    %v937 = vpop.f32.mrf.mxu0
    %v938 = vpop.f32.mrf.mxu0
    %v939 = vadd.f32 %v827, %v938
    %v940 = vpop.f32.mrf.mxu0
    %941 = vmatprep.mubr.bf16.mxu0 0
    %942 = vmatmul.mubr.bf16.gmra.mxu0 %v794
    %v943 = vpop.f32.mrf.mxu0
    %v944 = vadd.f32 %v827, %v943
    %v945 = vpop.f32.mrf.mxu0
    %v946 = vpop.f32.mrf.mxu0
    %v947 = vadd.f32 %v827, %v946
    %v948 = vpop.f32.mrf.mxu0
    %949 = vmatprep.mubr.bf16.mxu0 0
    %950 = vmatmul.mubr.bf16.gmra.mxu0 %v795
    %v951 = vpop.f32.mrf.mxu0
    %v952 = vadd.f32 %v827, %v951
    %v953 = vpop.f32.mrf.mxu0
    %v954 = vpop.f32.mrf.mxu0
    %v955 = vadd.f32 %v827, %v954
    %v956 = vpop.f32.mrf.mxu0
    %957 = vmatprep.mubr.bf16.mxu0 0
    %958 = vmatmul.mubr.bf16.gmra.mxu0 %v796
    %v959 = vpop.f32.mrf.mxu0
    %v960 = vadd.f32 %v827, %v959
    %v961 = vpop.f32.mrf.mxu0
    %v962 = vpop.f32.mrf.mxu0
    %v963 = vadd.f32 %v827, %v962
    %v964 = vpop.f32.mrf.mxu0
    %965 = vmatprep.mubr.bf16.mxu0 0
    %966 = vmatmul.mubr.bf16.gmra.mxu0 %v797
    %v967 = vpop.f32.mrf.mxu0
    %v968 = vadd.f32 %v827, %v967
    %v969 = vpop.f32.mrf.mxu0
    %v970 = vpop.f32.mrf.mxu0
    %v971 = vadd.f32 %v827, %v970
    %v972 = vpop.f32.mrf.mxu0
    %973 = vmatprep.mubr.bf16.mxu0 0
    %974 = vmatmul.mubr.bf16.gmra.mxu0 %v798
    %v975 = vpop.f32.mrf.mxu0
    %v976 = vadd.f32 %v827, %v975
    %v977 = vpop.f32.mrf.mxu0
    %v978 = vpop.f32.mrf.mxu0
    %v979 = vadd.f32 %v827, %v978
    %v980 = vpop.f32.mrf.mxu0
    %981 = vmatprep.mubr.bf16.mxu0 0
    %982 = vmatmul.mubr.bf16.gmra.mxu0 %v799
    %v983 = vpop.f32.mrf.mxu0
    %v984 = vadd.f32 %v827, %v983
    %v985 = vpop.f32.mrf.mxu0
    %v986 = vpop.f32.mrf.mxu0
    %v987 = vadd.f32 %v827, %v986
    %v988 = vpop.f32.mrf.mxu0
    %989 = vmatprep.mubr.bf16.mxu0 0
    %990 = vmatmul.mubr.bf16.gmra.mxu0 %v800
    %v991 = vpop.f32.mrf.mxu0
    %v992 = vadd.f32 %v827, %v991
    %v993 = vpop.f32.mrf.mxu0
    %v994 = vpop.f32.mrf.mxu0
    %v995 = vadd.f32 %v827, %v994
    %v996 = vpop.f32.mrf.mxu0
    %997 = vmatprep.mubr.bf16.mxu0 0
    %998 = vmatmul.mubr.bf16.gmra.mxu0 %v801
    %v999 = vpop.f32.mrf.mxu0
    %v1000 = vadd.f32 %v827, %v999
    %v1001 = vpop.f32.mrf.mxu0
    %v1002 = vpop.f32.mrf.mxu0
    %v1003 = vadd.f32 %v827, %v1002
    %v1004 = vpop.f32.mrf.mxu0
    %1005 = vmatprep.mubr.bf16.mxu0 0
    %1006 = vmatmul.mubr.bf16.gmra.mxu0 %v802
    %v1007 = vpop.f32.mrf.mxu0
    %v1008 = vadd.f32 %v827, %v1007
    %v1009 = vpop.f32.mrf.mxu0
    %v1010 = vpop.f32.mrf.mxu0
    %v1011 = vadd.f32 %v827, %v1010
    %v1012 = vpop.f32.mrf.mxu0
    %1013 = vmatprep.mubr.bf16.mxu0 0
    %1014 = vmatmul.mubr.bf16.gmra.mxu0 %v803
    %v1015 = vpop.f32.mrf.mxu0
    %v1016 = vadd.f32 %v827, %v1015
    %v1017 = vpop.f32.mrf.mxu0
    %v1018 = vpop.f32.mrf.mxu0
    %v1019 = vadd.f32 %v827, %v1018
    %v1020 = vpop.f32.mrf.mxu0
    %1021 = vmatprep.mubr.bf16.mxu0 0
    %1022 = vmatmul.mubr.bf16.gmra.mxu0 %v804
    %v1023 = vpop.f32.mrf.mxu0
    %v1024 = vadd.f32 %v827, %v1023
    %v1025 = vpop.f32.mrf.mxu0
    %v1026 = vpop.f32.mrf.mxu0
    %v1027 = vadd.f32 %v827, %v1026
    %v1028 = vpop.f32.mrf.mxu0
    %1029 = vmatprep.mubr.bf16.mxu0 0
    %1030 = vmatmul.mubr.bf16.gmra.mxu0 %v805
    %v1031 = vpop.f32.mrf.mxu0
    %v1032 = vadd.f32 %v827, %v1031
    %v1033 = vpop.f32.mrf.mxu0
    %v1034 = vpop.f32.mrf.mxu0
    %v1035 = vadd.f32 %v827, %v1034
    %v1036 = vpop.f32.mrf.mxu0
    %1037 = vdwg.mxu0
    %v1038 = vmax.f32 %v912, 0.0
    %v1039 = vmax.f32 %v915, 0.0
    %v1040 = vmax.f32 %v920, 0.0
    %v1041 = vmax.f32 %v923, 0.0
    %v1042 = vmax.f32 %v928, 0.0
    %v1043 = vmax.f32 %v931, 0.0
    %v1044 = vmax.f32 %v936, 0.0
    %v1045 = vmax.f32 %v939, 0.0
    %v1046 = vmax.f32 %v944, 0.0
    %v1047 = vmax.f32 %v947, 0.0
    %v1048 = vmax.f32 %v952, 0.0
    %v1049 = vmax.f32 %v955, 0.0
    %v1050 = vmax.f32 %v960, 0.0
    %v1051 = vmax.f32 %v963, 0.0
    %v1052 = vmax.f32 %v968, 0.0
    %v1053 = vmax.f32 %v971, 0.0
    %v1054 = vmax.f32 %v976, 0.0
    %v1055 = vmax.f32 %v979, 0.0
    %v1056 = vmax.f32 %v984, 0.0
    %v1057 = vmax.f32 %v987, 0.0
    %v1058 = vmax.f32 %v992, 0.0
    %v1059 = vmax.f32 %v995, 0.0
    %v1060 = vmax.f32 %v1000, 0.0
    %v1061 = vmax.f32 %v1003, 0.0
    %v1062 = vmax.f32 %v1008, 0.0
    %v1063 = vmax.f32 %v1011, 0.0
    %v1064 = vmax.f32 %v1016, 0.0
    %v1065 = vmax.f32 %v1019, 0.0
    %v1066 = vmax.f32 %v1024, 0.0
    %v1067 = vmax.f32 %v1027, 0.0
    %v1068 = vmax.f32 %v1032, 0.0
    %v1069 = vmax.f32 %v1035, 0.0
    %v1070 = vpack.c.bf16 %v1039, %v1038
    %v1071 = vpack.c.bf16 %v1041, %v1040
    %v1072 = vpack.c.bf16 %v1043, %v1042
    %v1073 = vpack.c.bf16 %v1045, %v1044
    %v1074 = vpack.c.bf16 %v1047, %v1046
    %v1075 = vpack.c.bf16 %v1049, %v1048
    %v1076 = vpack.c.bf16 %v1051, %v1050
    %v1077 = vpack.c.bf16 %v1053, %v1052
    %v1078 = vpack.c.bf16 %v1055, %v1054
    %v1079 = vpack.c.bf16 %v1057, %v1056
    %v1080 = vpack.c.bf16 %v1059, %v1058
    %v1081 = vpack.c.bf16 %v1061, %v1060
    %v1082 = vpack.c.bf16 %v1063, %v1062
    %v1083 = vpack.c.bf16 %v1065, %v1064
    %v1084 = vpack.c.bf16 %v1067, %v1066
    %v1085 = vpack.c.bf16 %v1069, %v1068
    %v1086 = vld [vmem:[%s7] sm:$0xf]
    %v1087 = vld [vmem:[%s7 + $0x4] sm:$0xf]
    %v1088 = vld [vmem:[%s7 + $0x8] sm:$0xf]
    %v1089 = vld [vmem:[%s7 + $0xc] sm:$0xf]
    %v1090 = vld [vmem:[%s7 + $0x10] sm:$0xf]
    %v1091 = vld [vmem:[%s7 + $0x14] sm:$0xf]
    %v1092 = vld [vmem:[%s7 + $0x18] sm:$0xf]
    %v1093 = vld [vmem:[%s7 + $0x1c] sm:$0xf]
    %v1094 = vld [vmem:[%s7 + $0x20] sm:$0xf]
    %v1095 = vld [vmem:[%s7 + $0x24] sm:$0xf]
    %v1096 = vld [vmem:[%s7 + $0x28] sm:$0xf]
    %v1097 = vld [vmem:[%s7 + $0x2c] sm:$0xf]
    %v1098 = vld [vmem:[%s7 + $0x30] sm:$0xf]
    %v1099 = vld [vmem:[%s7 + $0x34] sm:$0xf]
    %v1100 = vld [vmem:[%s7 + $0x38] sm:$0xf]
    %v1101 = vld [vmem:[%s7 + $0x3c] sm:$0xf]
    %v1102 = vld [vmem:[%s8] sm:$0x1]
    %v1104 = vlaneseq
    %v1105 = vshrl.u32 %v1104, 7
    %v1106 = vsub.s32 0, %v1105
    %v1107 = vrot.slane %v1102, %v1106
    %v1125 = vunpack.c.l.b16 %v1086
    %v1126 = vunpack.c.l.b16 %v1087
    %v1127 = vunpack.c.l.b16 %v1088
    %v1128 = vunpack.c.l.b16 %v1089
    %v1129 = vunpack.c.l.b16 %v1090
    %v1130 = vunpack.c.l.b16 %v1091
    %v1131 = vunpack.c.l.b16 %v1092
    %v1132 = vunpack.c.l.b16 %v1093
    %v1133 = vunpack.c.l.b16 %v1094
    %v1134 = vunpack.c.l.b16 %v1095
    %v1135 = vunpack.c.l.b16 %v1096
    %v1136 = vunpack.c.l.b16 %v1097
    %v1137 = vunpack.c.l.b16 %v1098
    %v1138 = vunpack.c.l.b16 %v1099
    %v1139 = vunpack.c.l.b16 %v1100
    %v1140 = vunpack.c.l.b16 %v1101
    %v1141 = vpack.c.b16 %v1126, %v1125
    %v1142 = vpack.c.b16 %v1128, %v1127
    %v1143 = vpack.c.b16 %v1130, %v1129
    %v1144 = vpack.c.b16 %v1132, %v1131
    %v1145 = vpack.c.b16 %v1134, %v1133
    %v1146 = vpack.c.b16 %v1136, %v1135
    %v1147 = vpack.c.b16 %v1138, %v1137
    %v1148 = vpack.c.b16 %v1140, %v1139
    %1157 = vmatprep.subr.bf16.mxu0 0
    %1158 = vmatpush1.bf16.msra.mxu0 %v1148
    %1159 = vmatprep.subr.bf16.mxu0 0
    %1160 = vmatpush1.bf16.msra.mxu0 %v1147
    %1161 = vmatprep.subr.bf16.mxu0 0
    %1162 = vmatpush1.bf16.msra.mxu0 %v1146
    %1163 = vmatprep.subr.bf16.mxu0 0
    %1164 = vmatpush1.bf16.msra.mxu0 %v1145
    %1165 = vmatprep.subr.bf16.mxu0 0
    %1166 = vmatpush1.bf16.msra.mxu0 %v1144
    %1167 = vmatprep.subr.bf16.mxu0 0
    %1168 = vmatpush1.bf16.msra.mxu0 %v1143
    %1169 = vmatprep.subr.bf16.mxu0 0
    %1170 = vmatpush1.bf16.msra.mxu0 %v1142
    %1171 = vmatprep.subr.bf16.mxu0 0
    %1172 = vmatpush1.bf16.msra.mxu0 %v1141
    %1173 = vmatprep.subr.bf16.mxu0 0
    %1174 = vmatpush2.bf16.msra.mxu0 0
    %1175 = vmatprep.subr.bf16.mxu0 0
    %1176 = vmatpush2.bf16.msra.mxu0 0
    %1177 = vmatprep.subr.bf16.mxu0 0
    %1178 = vmatpush2.bf16.msra.mxu0 0
    %1179 = vmatprep.subr.bf16.mxu0 0
    %1180 = vmatpush2.bf16.msra.mxu0 0
    %1181 = vmatprep.subr.bf16.mxu0 0
    %1182 = vmatpush2.bf16.msra.mxu0 0
    %1183 = vmatprep.subr.bf16.mxu0 0
    %1184 = vmatpush2.bf16.msra.mxu0 0
    %1185 = vmatprep.subr.bf16.mxu0 0
    %1186 = vmatpush2.bf16.msra.mxu0 0
    %1187 = vmatprep.subr.bf16.mxu0 0
    %1188 = vmatpush2.bf16.msra.mxu0 0
    %1189 = vmatprep.mubr.bf16.mxu0 0
    %1190 = vmatmul.mubr.bf16.gmra.mxu0 %v1070
    %v1191 = vpop.f32.mrf.mxu0
    %v1192 = vadd.f32 %v1107, %v1191
    %v1193 = vpop.f32.mrf.mxu0
    %v1194 = vpop.f32.mrf.mxu0
    %v1195 = vadd.f32 %v1107, %v1194
    %v1196 = vpop.f32.mrf.mxu0
    %1197 = vmatprep.mubr.bf16.mxu0 0
    %1198 = vmatmul.mubr.bf16.gmra.mxu0 %v1071
    %v1199 = vpop.f32.mrf.mxu0
    %v1200 = vadd.f32 %v1107, %v1199
    %v1201 = vpop.f32.mrf.mxu0
    %v1202 = vpop.f32.mrf.mxu0
    %v1203 = vadd.f32 %v1107, %v1202
    %v1204 = vpop.f32.mrf.mxu0
    %1205 = vmatprep.mubr.bf16.mxu0 0
    %1206 = vmatmul.mubr.bf16.gmra.mxu0 %v1072
    %v1207 = vpop.f32.mrf.mxu0
    %v1208 = vadd.f32 %v1107, %v1207
    %v1209 = vpop.f32.mrf.mxu0
    %v1210 = vpop.f32.mrf.mxu0
    %v1211 = vadd.f32 %v1107, %v1210
    %v1212 = vpop.f32.mrf.mxu0
    %1213 = vmatprep.mubr.bf16.mxu0 0
    %1214 = vmatmul.mubr.bf16.gmra.mxu0 %v1073
    %v1215 = vpop.f32.mrf.mxu0
    %v1216 = vadd.f32 %v1107, %v1215
    %v1217 = vpop.f32.mrf.mxu0
    %v1218 = vpop.f32.mrf.mxu0
    %v1219 = vadd.f32 %v1107, %v1218
    %v1220 = vpop.f32.mrf.mxu0
    %1221 = vmatprep.mubr.bf16.mxu0 0
    %1222 = vmatmul.mubr.bf16.gmra.mxu0 %v1074
    %v1223 = vpop.f32.mrf.mxu0
    %v1224 = vadd.f32 %v1107, %v1223
    %v1225 = vpop.f32.mrf.mxu0
    %v1226 = vpop.f32.mrf.mxu0
    %v1227 = vadd.f32 %v1107, %v1226
    %v1228 = vpop.f32.mrf.mxu0
    %1229 = vmatprep.mubr.bf16.mxu0 0
    %1230 = vmatmul.mubr.bf16.gmra.mxu0 %v1075
    %v1231 = vpop.f32.mrf.mxu0
    %v1232 = vadd.f32 %v1107, %v1231
    %v1233 = vpop.f32.mrf.mxu0
    %v1234 = vpop.f32.mrf.mxu0
    %v1235 = vadd.f32 %v1107, %v1234
    %v1236 = vpop.f32.mrf.mxu0
    %1237 = vmatprep.mubr.bf16.mxu0 0
    %1238 = vmatmul.mubr.bf16.gmra.mxu0 %v1076
    %v1239 = vpop.f32.mrf.mxu0
    %v1240 = vadd.f32 %v1107, %v1239
    %v1241 = vpop.f32.mrf.mxu0
    %v1242 = vpop.f32.mrf.mxu0
    %v1243 = vadd.f32 %v1107, %v1242
    %v1244 = vpop.f32.mrf.mxu0
    %1245 = vmatprep.mubr.bf16.mxu0 0
    %1246 = vmatmul.mubr.bf16.gmra.mxu0 %v1077
    %v1247 = vpop.f32.mrf.mxu0
    %v1248 = vadd.f32 %v1107, %v1247
    %v1249 = vpop.f32.mrf.mxu0
    %v1250 = vpop.f32.mrf.mxu0
    %v1251 = vadd.f32 %v1107, %v1250
    %v1252 = vpop.f32.mrf.mxu0
    %1253 = vmatprep.mubr.bf16.mxu0 0
    %1254 = vmatmul.mubr.bf16.gmra.mxu0 %v1078
    %v1255 = vpop.f32.mrf.mxu0
    %v1256 = vadd.f32 %v1107, %v1255
    %v1257 = vpop.f32.mrf.mxu0
    %v1258 = vpop.f32.mrf.mxu0
    %v1259 = vadd.f32 %v1107, %v1258
    %v1260 = vpop.f32.mrf.mxu0
    %1261 = vmatprep.mubr.bf16.mxu0 0
    %1262 = vmatmul.mubr.bf16.gmra.mxu0 %v1079
    %v1263 = vpop.f32.mrf.mxu0
    %v1264 = vadd.f32 %v1107, %v1263
    %v1265 = vpop.f32.mrf.mxu0
    %v1266 = vpop.f32.mrf.mxu0
    %v1267 = vadd.f32 %v1107, %v1266
    %v1268 = vpop.f32.mrf.mxu0
    %1269 = vmatprep.mubr.bf16.mxu0 0
    %1270 = vmatmul.mubr.bf16.gmra.mxu0 %v1080
    %v1271 = vpop.f32.mrf.mxu0
    %v1272 = vadd.f32 %v1107, %v1271
    %v1273 = vpop.f32.mrf.mxu0
    %v1274 = vpop.f32.mrf.mxu0
    %v1275 = vadd.f32 %v1107, %v1274
    %v1276 = vpop.f32.mrf.mxu0
    %1277 = vmatprep.mubr.bf16.mxu0 0
    %1278 = vmatmul.mubr.bf16.gmra.mxu0 %v1081
    %v1279 = vpop.f32.mrf.mxu0
    %v1280 = vadd.f32 %v1107, %v1279
    %v1281 = vpop.f32.mrf.mxu0
    %v1282 = vpop.f32.mrf.mxu0
    %v1283 = vadd.f32 %v1107, %v1282
    %v1284 = vpop.f32.mrf.mxu0
    %1285 = vmatprep.mubr.bf16.mxu0 0
    %1286 = vmatmul.mubr.bf16.gmra.mxu0 %v1082
    %v1287 = vpop.f32.mrf.mxu0
    %v1288 = vadd.f32 %v1107, %v1287
    %v1289 = vpop.f32.mrf.mxu0
    %v1290 = vpop.f32.mrf.mxu0
    %v1291 = vadd.f32 %v1107, %v1290
    %v1292 = vpop.f32.mrf.mxu0
    %1293 = vmatprep.mubr.bf16.mxu0 0
    %1294 = vmatmul.mubr.bf16.gmra.mxu0 %v1083
    %v1295 = vpop.f32.mrf.mxu0
    %v1296 = vadd.f32 %v1107, %v1295
    %v1297 = vpop.f32.mrf.mxu0
    %v1298 = vpop.f32.mrf.mxu0
    %v1299 = vadd.f32 %v1107, %v1298
    %v1300 = vpop.f32.mrf.mxu0
    %1301 = vmatprep.mubr.bf16.mxu0 0
    %1302 = vmatmul.mubr.bf16.gmra.mxu0 %v1084
    %v1303 = vpop.f32.mrf.mxu0
    %v1304 = vadd.f32 %v1107, %v1303
    %v1305 = vpop.f32.mrf.mxu0
    %v1306 = vpop.f32.mrf.mxu0
    %v1307 = vadd.f32 %v1107, %v1306
    %v1308 = vpop.f32.mrf.mxu0
    %1309 = vmatprep.mubr.bf16.mxu0 0
    %1310 = vmatmul.mubr.bf16.gmra.mxu0 %v1085
    %v1311 = vpop.f32.mrf.mxu0
    %v1312 = vadd.f32 %v1107, %v1311
    %v1313 = vpop.f32.mrf.mxu0
    %v1314 = vpop.f32.mrf.mxu0
    %v1315 = vadd.f32 %v1107, %v1314
    %v1316 = vpop.f32.mrf.mxu0
    %1317 = vdwg.mxu0
    %v1318 = vmax.f32 %v1192, 0.0
    %v1319 = vmax.f32 %v1195, 0.0
    %v1320 = vmax.f32 %v1200, 0.0
    %v1321 = vmax.f32 %v1203, 0.0
    %v1322 = vmax.f32 %v1208, 0.0
    %v1323 = vmax.f32 %v1211, 0.0
    %v1324 = vmax.f32 %v1216, 0.0
    %v1325 = vmax.f32 %v1219, 0.0
    %v1326 = vmax.f32 %v1224, 0.0
    %v1327 = vmax.f32 %v1227, 0.0
    %v1328 = vmax.f32 %v1232, 0.0
    %v1329 = vmax.f32 %v1235, 0.0
    %v1330 = vmax.f32 %v1240, 0.0
    %v1331 = vmax.f32 %v1243, 0.0
    %v1332 = vmax.f32 %v1248, 0.0
    %v1333 = vmax.f32 %v1251, 0.0
    %v1334 = vmax.f32 %v1256, 0.0
    %v1335 = vmax.f32 %v1259, 0.0
    %v1336 = vmax.f32 %v1264, 0.0
    %v1337 = vmax.f32 %v1267, 0.0
    %v1338 = vmax.f32 %v1272, 0.0
    %v1339 = vmax.f32 %v1275, 0.0
    %v1340 = vmax.f32 %v1280, 0.0
    %v1341 = vmax.f32 %v1283, 0.0
    %v1342 = vmax.f32 %v1288, 0.0
    %v1343 = vmax.f32 %v1291, 0.0
    %v1344 = vmax.f32 %v1296, 0.0
    %v1345 = vmax.f32 %v1299, 0.0
    %v1346 = vmax.f32 %v1304, 0.0
    %v1347 = vmax.f32 %v1307, 0.0
    %v1348 = vmax.f32 %v1312, 0.0
    %v1349 = vmax.f32 %v1315, 0.0
    %v1350 = vpack.c.bf16 %v1319, %v1318
    %v1351 = vpack.c.bf16 %v1321, %v1320
    %v1352 = vpack.c.bf16 %v1323, %v1322
    %v1353 = vpack.c.bf16 %v1325, %v1324
    %v1354 = vpack.c.bf16 %v1327, %v1326
    %v1355 = vpack.c.bf16 %v1329, %v1328
    %v1356 = vpack.c.bf16 %v1331, %v1330
    %v1357 = vpack.c.bf16 %v1333, %v1332
    %v1358 = vpack.c.bf16 %v1335, %v1334
    %v1359 = vpack.c.bf16 %v1337, %v1336
    %v1360 = vpack.c.bf16 %v1339, %v1338
    %v1361 = vpack.c.bf16 %v1341, %v1340
    %v1362 = vpack.c.bf16 %v1343, %v1342
    %v1363 = vpack.c.bf16 %v1345, %v1344
    %v1364 = vpack.c.bf16 %v1347, %v1346
    %v1365 = vpack.c.bf16 %v1349, %v1348
    %v1366 = vld [vmem:[%s9] sm:$0xf]
    %v1367 = vld [vmem:[%s10] sm:$0xff]
    %1369 = vset.pattern.permute.xlu0 0
    %1370 = vperm.xlu0 %1369, %v1367
    %v1371 = vpop.permute.xlu0 %1370
    %1373 = vmatprep.subr.bf16.mxu0 0
    %1374 = vmatpush1.bf16.xpose.msra.mxu0 %v1357
    %1375 = vmatprep.subr.bf16.mxu0 0
    %1376 = vmatpush1.bf16.xpose.msra.mxu0 %v1356
    %1377 = vmatprep.subr.bf16.mxu0 0
    %1378 = vmatpush1.bf16.xpose.msra.mxu0 %v1355
    %1379 = vmatprep.subr.bf16.mxu0 0
    %1380 = vmatpush1.bf16.xpose.msra.mxu0 %v1354
    %1381 = vmatprep.subr.bf16.mxu0 0
    %1382 = vmatpush1.bf16.xpose.msra.mxu0 %v1353
    %1383 = vmatprep.subr.bf16.mxu0 0
    %1384 = vmatpush1.bf16.xpose.msra.mxu0 %v1352
    %1385 = vmatprep.subr.bf16.mxu0 0
    %1386 = vmatpush1.bf16.xpose.msra.mxu0 %v1351
    %1387 = vmatprep.subr.bf16.mxu0 0
    %1388 = vmatpush1.bf16.xpose.msra.mxu0 %v1350
    %1389 = vmatprep.subr.bf16.mxu0 0
    %1390 = vmatpush2.bf16.xpose.msra.mxu0 %v1365
    %1391 = vmatprep.subr.bf16.mxu0 0
    %1392 = vmatpush2.bf16.xpose.msra.mxu0 %v1364
    %1393 = vmatprep.subr.bf16.mxu0 0
    %1394 = vmatpush2.bf16.xpose.msra.mxu0 %v1363
    %1395 = vmatprep.subr.bf16.mxu0 0
    %1396 = vmatpush2.bf16.xpose.msra.mxu0 %v1362
    %1397 = vmatprep.subr.bf16.mxu0 0
    %1398 = vmatpush2.bf16.xpose.msra.mxu0 %v1361
    %1399 = vmatprep.subr.bf16.mxu0 0
    %1400 = vmatpush2.bf16.xpose.msra.mxu0 %v1360
    %1401 = vmatprep.subr.bf16.mxu0 0
    %1402 = vmatpush2.bf16.xpose.msra.mxu0 %v1359
    %1403 = vmatprep.subr.bf16.mxu0 0
    %1404 = vmatpush2.bf16.xpose.msra.mxu0 %v1358
    %1405 = vmatprep.mubr.bf16.mxu0 0
    %1406 = vmatmul.mubr.bf16.gmra.mxu0 %v1366
    %v1407 = vpop.f32.mrf.mxu0
    %v1408 = vadd.f32 %v1371, %v1407
    %v1409 = vpop.f32.mrf.mxu0
    %v1410 = vadd.f32 %v1371, %v1409
    %v1411 = vpop.f32.mrf.mxu0
    %v1412 = vpop.f32.mrf.mxu0
    %1413 = vdwg.mxu0
    %1414 = vst [vmem:[#allocation2] sm:$0xff] %v1408
    %1415 = vst [vmem:[#allocation2 + $0x8] sm:$0xff] %v1410
    // Predicated region
    $region46: #{tpu_custom_call.1} parent=1 // pred_check
      _
    $region47: #{tpu_custom_call.1} parent=1 // pred_check_branch
      %1417 = sbr.rel (0) target = $region49
    $region48: #{tpu_custom_call.1} parent=1 // pred_region
      %s1419 = ssub.s32 256, 256
      %1420 = vsyncadd [#allocation3], %s1419
      %s1422 = sshll.u32 [#allocation2], 4
      %s1423 = int_to_ptr.vmem [resolvable:$true] %s1422
      %1425 = dma.vmem_to_hbm [thread:$0]  %s1423, 256, %s11, [#allocation3]
    $region49: #{tpu_custom_call.1} parent=1 // pred_fallthru
      _
    // Predicated region
    $region50: #{tpu_custom_call.1} parent=1 // pred_check
      _
    $region51: #{tpu_custom_call.1} parent=1 // pred_check_branch
      %1427 = sbr.rel (0) target = $region53
    $region52: #{tpu_custom_call.1} parent=1 // pred_region
      %1428 = dma.done [#allocation3], 256
    $region53: #{tpu_custom_call.1} parent=1 // pred_fallthru
      _
    %1429 = vsyncpa [#allocation3], 1

</llo_original>
